<compile_context>
chip_gen: v7x
topology: tpu7x:2x2x1
jax: 0.10.0
libtpu: 0.0.40
codegen_flags: <defaults>
</compile_context>

<pallas_src>
from functools import partial

import numpy as np
import jax
import jax.numpy as jnp
from jax.experimental import pallas as pl
from jax.experimental.pallas import tpu as pltpu

EPS = 1e-5  # BatchNorm2d default eps


def _round_up(a, m):
    return (a + m - 1) // m * m


# ----------------------------- Pallas kernels ----------------------------- #

def _stats_kernel(x_ref, sx_ref, sxx_ref):
    # x_ref: (C_in, TILE).  Accumulate sum(x) and sum(x x^T) over pixel tiles.
    @pl.when(pl.program_id(0) == 0)
    def _():
        sx_ref[...] = jnp.zeros_like(sx_ref)
        sxx_ref[...] = jnp.zeros_like(sxx_ref)

    xt = x_ref[...]
    sx_ref[...] += jnp.sum(xt, axis=1, keepdims=True)                      # (C_in, 1)
    sxx_ref[...] += jax.lax.dot_general(                                   # (C_in, C_in)
        xt, xt, (((1,), (1,)), ((), ())), preferred_element_type=jnp.float32)


def _conv_bn_sigmoid_kernel(x_ref, w_ref, shift_ref, o_ref):
    # Folded-BN 1x1 conv + sigmoid on one lane-dense pixel tile.
    # x_ref: (C_in, TILE)  w_ref: (C_out, C_in) = scale*W  shift_ref: (C_out, 1)
    y = jnp.dot(w_ref[...], x_ref[...], preferred_element_type=jnp.float32) + shift_ref[...]
    o_ref[...] = jax.nn.sigmoid(y)


def _make_bilinear_kernel(cg, hin):
    def kernel(s_ref, rh_ref, rwt_ref, o_ref):
        # s_ref:   (cg*hin, Win)  -- cg channels stacked along rows
        # rh_ref:  (Hout, hin)    rwt_ref: (Win, Wpad)   o_ref: (cg, Hout, Wpad)
        # W-resize for all cg channels in ONE matmul (big M), then the H-resize
        # per channel (static unrolled 2D dots; Wpad is 128-lane dense).
        t = jnp.dot(s_ref[...], rwt_ref[...], preferred_element_type=jnp.float32)
        rh = rh_ref[...]
        for c in range(cg):
            o_ref[c] = jnp.dot(rh, t[c * hin:(c + 1) * hin, :],
                               preferred_element_type=jnp.float32)
    return kernel


# ------------------------------ helpers ------------------------------------ #

def _bilinear_matrix(out_size, in_size):
    # PyTorch upsample_bilinear2d, align_corners=False source-index rule.
    o = np.arange(out_size)
    scale = in_size / out_size
    src = np.maximum((o + 0.5) * scale - 0.5, 0.0)
    i0 = np.minimum(np.floor(src).astype(np.int64), in_size - 1)
    i1 = np.minimum(i0 + 1, in_size - 1)
    frac = src - i0
    r = np.zeros((out_size, in_size), dtype=np.float32)
    r[o, i0] += (1.0 - frac)
    r[o, i1] += frac
    return r


@partial(jax.jit, static_argnames=("up_size",))
def model_forward(x, w, b, gamma, beta, up_size):
    """x: (1, C_in, H, W) float32 NCHW. Returns (1, C_out, H_out, W_out)."""
    del b  # conv bias is cancelled exactly by the BN (batch-stats) mean subtraction
    n, cin, h, wd = x.shape
    assert n == 1, "matches the reference input (batch 1)"
    cout = w.shape[0]
    hout, wout = up_size
    p = h * wd

    # Lane-dense pixel tiling; padding with zeros does not change the x sums.
    tile = min(8192, _round_up(p, 128))
    pp = _round_up(p, tile)
    nt = pp // tile

    x2 = x.reshape(cin, p).astype(jnp.float32)
    x2 = jnp.pad(x2, ((0, 0), (0, pp - p)))

    # ---- Pass 1: tiny reduction over x (sum x, sum x x^T), P-tiled accumulator.
    sx, sxx = pl.pallas_call(
        _stats_kernel,
        out_shape=(jax.ShapeDtypeStruct((cin, 1), jnp.float32),
                   jax.ShapeDtypeStruct((cin, cin), jnp.float32)),
        grid=(nt,),
        in_specs=[pl.BlockSpec((cin, tile), lambda i: (0, i))],
        out_specs=(pl.BlockSpec((cin, 1), lambda i: (0, 0)),
                   pl.BlockSpec((cin, cin), lambda i: (0, 0))),
        compiler_params=pltpu.CompilerParams(dimension_semantics=("arbitrary",)),
    )(x2)

    # ---- Fold training-mode BatchNorm into the 1x1 conv (12-scalar glue math):
    #   y = Wx + b,  mean_y = W mu + b,  var_y = diag(W Sigma W^T)   (biased Sigma)
    #   z = gamma*(y-mean_y)*rsqrt(var_y+eps) + beta = (scale*W) x + (beta - scale*(W mu))
    mu = sx / p                                  # (C_in, 1)
    cov = sxx / p - mu @ mu.T                    # (C_in, C_in), biased covariance
    var_y = jnp.einsum("oi,ij,oj->o", w, cov, w)
    scale = gamma * jax.lax.rsqrt(var_y + EPS)
    w_eff = scale[:, None] * w                   # (C_out, C_in)
    shift = (beta - scale * (w @ mu)[:, 0]).reshape(cout, 1)

    # ---- Pass 2: fused folded-BN conv + sigmoid, lane-dense (C_out, TILE) output.
    s = pl.pallas_call(
        _conv_bn_sigmoid_kernel,
        out_shape=jax.ShapeDtypeStruct((cout, pp), jnp.float32),
        grid=(nt,),
        in_specs=[pl.BlockSpec((cin, tile), lambda i: (0, i)),
                  pl.BlockSpec((cout, cin), lambda i: (0, 0)),
                  pl.BlockSpec((cout, 1), lambda i: (0, 0))],
        out_specs=pl.BlockSpec((cout, tile), lambda i: (0, i)),
        compiler_params=pltpu.CompilerParams(dimension_semantics=("parallel",)),
    )(x2, w_eff, shift)

    if (hout, wout) == (h, wd):
        # align_corners=False with out_size == in_size is an exact identity resize
        # (the production 480x270 -> 480x270 config hits this path).
        return s[:, :p].reshape(1, cout, h, wd)

    # ---- General bilinear path: separable resize as two matmuls, channels batched,
    #      output lane-padded to a multiple of 128 so stores are unmasked.
    rh = jnp.asarray(_bilinear_matrix(hout, h))      # (Hout, Hin)
    rw = _bilinear_matrix(wout, wd)                  # (Wout, Win)
    wpad = _round_up(wout, 128)
    rwt = np.zeros((wd, wpad), np.float32)
    rwt[:, :wout] = rw.T
    rwt = jnp.asarray(rwt)

    cg = 8 if cout % 8 == 0 else cout                # channels per grid step
    s2d = s[:, :p].reshape(cout * h, wd)             # stack channels along rows

    o = pl.pallas_call(
        _make_bilinear_kernel(cg, h),
        out_shape=jax.ShapeDtypeStruct((cout, hout, wpad), jnp.float32),
        grid=(cout // cg,),
        in_specs=[pl.BlockSpec((cg * h, wd), lambda g: (g, 0)),
                  pl.BlockSpec((hout, h), lambda g: (0, 0)),
                  pl.BlockSpec((wd, wpad), lambda g: (0, 0))],
        out_specs=pl.BlockSpec((cg, hout, wpad), lambda g: (g, 0, 0)),
        compiler_params=pltpu.CompilerParams(dimension_semantics=("parallel",)),
    )(s2d, rh, rwt)
    return o[:, :, :wout][None]


def reference(x, w, b, gamma, beta, up_size):
    # Pure-JAX reference of the PyTorch forward (training-mode BN, bilinear resize).
    y = jnp.einsum("oc,nchw->nohw", w, x) + b[None, :, None, None]
    mean = jnp.mean(y, axis=(0, 2, 3), keepdims=True)
    var = jnp.mean((y - mean) ** 2, axis=(0, 2, 3), keepdims=True)
    z = (y - mean) * jax.lax.rsqrt(var + EPS)
    z = z * gamma[None, :, None, None] + beta[None, :, None, None]
    s = jax.nn.sigmoid(z)
    rh = jnp.asarray(_bilinear_matrix(up_size[0], x.shape[2]))
    rw = jnp.asarray(_bilinear_matrix(up_size[1], x.shape[3]))
    return jnp.einsum("oh,nchw,pw->ncop", rh, s, rw)


# -------------------------------- main ------------------------------------- #

if __name__ == "__main__":
    key = jax.random.PRNGKey(0)
    k1, k2, k3, k4 = jax.random.split(key, 4)

    C_IN, C_OUT = 3, 32
    w = jax.random.normal(k2, (C_OUT, C_IN), jnp.float32) * 0.2   # conv1 weight (1x1 kernel)
    b = jax.random.normal(k3, (C_OUT,), jnp.float32) * 0.1        # conv1 bias
    gamma = jnp.ones((C_OUT,), jnp.float32)                       # BatchNorm2d default weight
    beta = jnp.zeros((C_OUT,), jnp.float32)                       # BatchNorm2d default bias

    # Case 1: module config scaled down 10x (480x270 -> 48x27, identity upsample path).
    H1, W1 = 48, 27
    x1 = jax.random.normal(k1, (1, C_IN, H1, W1), jnp.float32)
    out1 = jax.block_until_ready(model_forward(x1, w, b, gamma, beta, (H1, W1)))
    ref1 = jax.block_until_ready(reference(x1, w, b, gamma, beta, (H1, W1)))
    assert out1.shape == (1, C_OUT, H1, W1), out1.shape
    assert float(jnp.max(jnp.abs(out1 - ref1))) < 2e-4

    # Case 2: exercise the general (non-identity) bilinear kernel on a small input.
    H2, W2, UP2 = 32, 16, (48, 27)
    x2 = jax.random.normal(k4, (1, C_IN, H2, W2), jnp.float32)
    out2 = jax.block_until_ready(model_forward(x2, w, b, gamma, beta, UP2))
    ref2 = jax.block_until_ready(reference(x2, w, b, gamma, beta, UP2))
    assert out2.shape == (1, C_OUT, UP2[0], UP2[1]), out2.shape
    assert float(jnp.max(jnp.abs(out2 - ref2))) < 2e-4

    print("KERNEL_OK")
</pallas_src>

<mosaic_0001>
module attributes {stable_mosaic.version = 11 : i64} {
  func.func @_stats_kernel(%arg0: i32, %arg1: memref<3x1408xf32, #tpu.memory_space<vmem>>, %arg2: memref<3x1xf32, #tpu.memory_space<vmem>>, %arg3: memref<3x3xf32, #tpu.memory_space<vmem>>) attributes {dimension_semantics = [#tpu.dimension_semantics<arbitrary>], iteration_bounds = array<i64: 1>, scalar_prefetch = 0 : i64, scratch_operands = 0 : i64, tpu.core_type = #tpu.core_type<tc>, window_params = [{transform_indices = @transform_0, window_bounds = array<i64: 3, 1408>}, {pipeline_mode = #tpu.pipeline_mode<synchronous>, transform_indices = @transform_1, window_bounds = array<i64: 3, 1>}, {pipeline_mode = #tpu.pipeline_mode<synchronous>, transform_indices = @transform_2, window_bounds = array<i64: 3, 3>}]} {
    %c0_i32 = arith.constant 0 : i32
    %0 = arith.cmpi eq, %arg0, %c0_i32 : i32
    %1 = arith.extui %0 : i1 to i32
    %c0_i32_0 = arith.constant 0 : i32
    %2 = arith.cmpi ne, %1, %c0_i32_0 : i32
    scf.if %2 {
      %cst_11 = arith.constant 0.000000e+00 : f32
      %13 = vector.broadcast %cst_11 : f32 to vector<3x1xf32>
      %c0_12 = arith.constant 0 : index
      %c0_13 = arith.constant 0 : index
      %14 = vector.load %arg2[%c0_12, %c0_13] : memref<3x1xf32, #tpu.memory_space<vmem>>, vector<3x1xf32>
      tpu.vector_store %arg2[%c0_12, %c0_13], %13 {strides = array<i32>} : memref<3x1xf32, #tpu.memory_space<vmem>>, vector<3x1xf32>,
      %cst_14 = arith.constant 0.000000e+00 : f32
      %15 = vector.broadcast %cst_14 : f32 to vector<3x3xf32>
      %c0_15 = arith.constant 0 : index
      %c0_16 = arith.constant 0 : index
      %16 = vector.load %arg3[%c0_15, %c0_16] : memref<3x3xf32, #tpu.memory_space<vmem>>, vector<3x3xf32>
      tpu.vector_store %arg3[%c0_15, %c0_16], %15 {strides = array<i32>} : memref<3x3xf32, #tpu.memory_space<vmem>>, vector<3x3xf32>,
    } else {
    }
    %c0 = arith.constant 0 : index
    %c0_1 = arith.constant 0 : index
    %3 = vector.load %arg1[%c0, %c0_1] : memref<3x1408xf32, #tpu.memory_space<vmem>>, vector<3x1408xf32>
    %c0_2 = arith.constant 0 : index
    %c0_3 = arith.constant 0 : index
    %4 = vector.load %arg2[%c0_2, %c0_3] : memref<3x1xf32, #tpu.memory_space<vmem>>, vector<3x1xf32>
    %cst = arith.constant dense<0.000000e+00> : vector<3xf32>
    %5 = vector.multi_reduction <add>, %3, %cst [1] : vector<3x1408xf32> to vector<3xf32>
    %6 = vector.shape_cast %5 : vector<3xf32> to vector<3x1xf32>
    %7 = arith.addf %4, %6 : vector<3x1xf32>
    %c0_4 = arith.constant 0 : index
    %c0_5 = arith.constant 0 : index
    %8 = vector.load %arg2[%c0_4, %c0_5] : memref<3x1xf32, #tpu.memory_space<vmem>>, vector<3x1xf32>
    tpu.vector_store %arg2[%c0_4, %c0_5], %7 {strides = array<i32>} : memref<3x1xf32, #tpu.memory_space<vmem>>, vector<3x1xf32>,
    %c0_6 = arith.constant 0 : index
    %c0_7 = arith.constant 0 : index
    %9 = vector.load %arg3[%c0_6, %c0_7] : memref<3x3xf32, #tpu.memory_space<vmem>>, vector<3x3xf32>
    %cst_8 = arith.constant dense<0.000000e+00> : vector<3x3xf32>
    %10 = tpu.matmul %3, %3, %cst_8 {dimension_numbers = #tpu.dot_dimension_numbers<[1], [1], [0], [0], [0, 0, 1, 0], [], []>} : vector<3x1408xf32>, vector<3x1408xf32>, vector<3x3xf32> -> vector<3x3xf32>
    %11 = arith.addf %9, %10 : vector<3x3xf32>
    %c0_9 = arith.constant 0 : index
    %c0_10 = arith.constant 0 : index
    %12 = vector.load %arg3[%c0_9, %c0_10] : memref<3x3xf32, #tpu.memory_space<vmem>>, vector<3x3xf32>
    tpu.vector_store %arg3[%c0_9, %c0_10], %11 {strides = array<i32>} : memref<3x3xf32, #tpu.memory_space<vmem>>, vector<3x3xf32>,
    return
  }
  func.func @transform_0(%arg0: i32) -> (i32, i32) {
    %c0_i32 = arith.constant 0 : i32
    %c0_i32_0 = arith.constant 0 : i32
    return %c0_i32, %arg0 : i32, i32
  }
  func.func @transform_1(%arg0: i32) -> (i32, i32) {
    %c0_i32 = arith.constant 0 : i32
    %c0_i32_0 = arith.constant 0 : i32
    %c0_i32_1 = arith.constant 0 : i32
    return %c0_i32, %c0_i32_0 : i32, i32
  }
  func.func @transform_2(%arg0: i32) -> (i32, i32) {
    %c0_i32 = arith.constant 0 : i32
    %c0_i32_0 = arith.constant 0 : i32
    %c0_i32_1 = arith.constant 0 : i32
    return %c0_i32, %c0_i32_0 : i32, i32
  }
}

module attributes {stable_mosaic.version = 11 : i64} {
  func.func @_conv_bn_sigmoid_kernel(%arg0: i32, %arg1: memref<3x1408xf32, #tpu.memory_space<vmem>>, %arg2: memref<32x3xf32, #tpu.memory_space<vmem>>, %arg3: memref<32x1xf32, #tpu.memory_space<vmem>>, %arg4: memref<32x1408xf32, #tpu.memory_space<vmem>>) attributes {dimension_semantics = [#tpu.dimension_semantics<parallel>], iteration_bounds = array<i64: 1>, scalar_prefetch = 0 : i64, scratch_operands = 0 : i64, tpu.core_type = #tpu.core_type<tc>, window_params = [{transform_indices = @transform_0, window_bounds = array<i64: 3, 1408>}, {pipeline_mode = #tpu.pipeline_mode<synchronous>, transform_indices = @transform_1, window_bounds = array<i64: 32, 3>}, {pipeline_mode = #tpu.pipeline_mode<synchronous>, transform_indices = @transform_2, window_bounds = array<i64: 32, 1>}, {transform_indices = @transform_3, window_bounds = array<i64: 32, 1408>}]} {
    %c0 = arith.constant 0 : index
    %c0_0 = arith.constant 0 : index
    %0 = vector.load %arg2[%c0, %c0_0] : memref<32x3xf32, #tpu.memory_space<vmem>>, vector<32x3xf32>
    %c0_1 = arith.constant 0 : index
    %c0_2 = arith.constant 0 : index
    %1 = vector.load %arg1[%c0_1, %c0_2] : memref<3x1408xf32, #tpu.memory_space<vmem>>, vector<3x1408xf32>
    %cst = arith.constant dense<0.000000e+00> : vector<32x1408xf32>
    %2 = tpu.matmul %0, %1, %cst {dimension_numbers = #tpu.dot_dimension_numbers<[1], [0], [0], [1], [0, 0, 1, 1], [], []>} : vector<32x3xf32>, vector<3x1408xf32>, vector<32x1408xf32> -> vector<32x1408xf32>
    %c0_3 = arith.constant 0 : index
    %c0_4 = arith.constant 0 : index
    %3 = vector.load %arg3[%c0_3, %c0_4] : memref<32x1xf32, #tpu.memory_space<vmem>>, vector<32x1xf32>
    %4 = vector.broadcast %3 : vector<32x1xf32> to vector<32x1408xf32>
    %5 = arith.addf %2, %4 : vector<32x1408xf32>
    %6 = arith.negf %5 : vector<32x1408xf32>
    %7 = math.exp %6 : vector<32x1408xf32>
    %cst_5 = arith.constant 1.000000e+00 : f32
    %8 = vector.broadcast %cst_5 : f32 to vector<32x1408xf32>
    %9 = arith.addf %8, %7 : vector<32x1408xf32>
    %10 = arith.divf %8, %9 : vector<32x1408xf32>
    %c0_6 = arith.constant 0 : index
    %c0_7 = arith.constant 0 : index
    %11 = vector.load %arg4[%c0_6, %c0_7] : memref<32x1408xf32, #tpu.memory_space<vmem>>, vector<32x1408xf32>
    tpu.vector_store %arg4[%c0_6, %c0_7], %10 {strides = array<i32>} : memref<32x1408xf32, #tpu.memory_space<vmem>>, vector<32x1408xf32>,
    return
  }
  func.func @transform_0(%arg0: i32) -> (i32, i32) {
    %c0_i32 = arith.constant 0 : i32
    %c0_i32_0 = arith.constant 0 : i32
    return %c0_i32, %arg0 : i32, i32
  }
  func.func @transform_1(%arg0: i32) -> (i32, i32) {
    %c0_i32 = arith.constant 0 : i32
    %c0_i32_0 = arith.constant 0 : i32
    %c0_i32_1 = arith.constant 0 : i32
    return %c0_i32, %c0_i32_0 : i32, i32
  }
  func.func @transform_2(%arg0: i32) -> (i32, i32) {
    %c0_i32 = arith.constant 0 : i32
    %c0_i32_0 = arith.constant 0 : i32
    %c0_i32_1 = arith.constant 0 : i32
    return %c0_i32, %c0_i32_0 : i32, i32
  }
  func.func @transform_3(%arg0: i32) -> (i32, i32) {
    %c0_i32 = arith.constant 0 : i32
    %c0_i32_0 = arith.constant 0 : i32
    return %c0_i32, %arg0 : i32, i32
  }
}

</mosaic_0001>

<llo_original>
// kernel: model_forward.2
$region0: #{model_forward.2}
  #allocation0 [shape = 'u32[]', space=smem, size = 0x4, offset = 0x4, fixed_abs, tag = 'smem constant byte address 0x4 - core index']
  #allocation1 [shape = 'u32[144,128]{1,0:T(1,128)}', space=vmem, size = 0x12000, scoped, tag = 'internal scratch']
  %s0 = inlined_call_operand.vmem [shape: f32[3,1408], index: 0, kind: input, shape index: {}]
  %s1 = inlined_call_operand.vmem [shape: f32[3,1], index: 1, kind: output, shape index: {0}]
  %s2 = inlined_call_operand.vmem [shape: f32[3,3], index: 2, kind: output, shape index: {1}]
  %3 = xla_tuple %s1, %s2
  %s4 = sld [smem:[#allocation0]]
  $region26: #{model_forward.2} parent=0
    _
  %s6 = ssub.s32 1, %s4
  %s7 = scalar_select 0, %s6, %s4
  // Predicated region
  $region2: #{model_forward.2} parent=0 // pred_check
    _
  $region3: #{model_forward.2} parent=0 // pred_check_branch
    %9 = sbr.rel (0) target = $region5
  $region4: #{model_forward.2} parent=0 // pred_region
    _
  $region5: #{model_forward.2} parent=0 // pred_fallthru
    _
  %p10 = scmp.eq.s32.totalorder 0, 0
  // Predicated region
  $region6: #{model_forward.2} parent=0 // pred_check
    %p11 = pneg %p10
  $region7: #{model_forward.2} parent=0 // pred_check_branch
    %13 = sbr.rel (%p11) target = $region9
  $region8: #{model_forward.2} parent=0 // pred_region
    %vm14 = vcmask 2048
    %15 = vst.msk [vmem:[%s1] sm:$0x7] %vm14, 0.0
    %vm16 = vcmask 18432
    %17 = vst.msk [vmem:[%s2] sm:$0x7] %vm16, 0.0
  $region9: #{model_forward.2} parent=0 // pred_fallthru
    _
  %v18 = vld [vmem:[%s0] sm:$0x77]
  %v19 = vld [vmem:[%s0 + $0x8] sm:$0x77]
  %v20 = vld [vmem:[%s0 + $0x10] sm:$0x77]
  %v21 = vld [vmem:[%s0 + $0x18] sm:$0x77]
  %v22 = vld [vmem:[%s0 + $0x20] sm:$0x77]
  %v23 = vld [vmem:[%s0 + $0x28] sm:$0x7]
  %v24 = vld [vmem:[%s1] sm:$0x7]
  %v30 = vcombine.high %v18, %v18
  %v31 = vcombine.high %v19, %v19
  %v32 = vcombine.high %v20, %v20
  %v33 = vcombine.high %v21, %v21
  %v34 = vcombine.high %v22, %v22
  %vm40 = vcmask 1042432
  %v41 = vsel %vm40, %v18, 0.0
  %v42 = vsel %vm40, %v30, 0.0
  %v43 = vadd.f32 %v41, %v42
  %v44 = vsel %vm40, %v19, 0.0
  %v45 = vadd.f32 %v43, %v44
  %v46 = vsel %vm40, %v31, 0.0
  %v47 = vadd.f32 %v45, %v46
  %v48 = vsel %vm40, %v20, 0.0
  %v49 = vadd.f32 %v47, %v48
  %v50 = vsel %vm40, %v32, 0.0
  %v51 = vadd.f32 %v49, %v50
  %v52 = vsel %vm40, %v21, 0.0
  %v53 = vadd.f32 %v51, %v52
  %v54 = vsel %vm40, %v33, 0.0
  %v55 = vadd.f32 %v53, %v54
  %v56 = vsel %vm40, %v22, 0.0
  %v57 = vadd.f32 %v55, %v56
  %v58 = vsel %vm40, %v34, 0.0
  %v59 = vadd.f32 %v57, %v58
  %v60 = vsel %vm40, %v23, 0.0
  %v61 = vadd.f32 %v59, %v60
  %62 = vadd.xlane.f32.xlu0 %v61
  %v63 = vpop.xlane.xlu0 %62
  %v64 = vadd.f32 %v24, %v63
  %vm65 = vcmask 2048
  %66 = vst.msk [vmem:[%s1] sm:$0x7] %vm65, %v64
  %v67 = vld [vmem:[%s2] sm:$0x7]
  %68 = vmatprep.subr.mxu0 %v30
  %69 = vmatpush1.xpose.msra.mxu0 %v18
  %70 = vmatprep.subr.mxu0 0.0
  %71 = vmatpush1.xpose.msra.mxu0 0.0
  %72 = vmatprep.subr.mxu0 0.0
  %73 = vmatpush1.xpose.msra.mxu0 0.0
  %74 = vmatprep.subr.mxu0 0.0
  %75 = vmatpush1.xpose.msra.mxu0 0.0
  %76 = vmatprep.subr.mxu0 0.0
  %77 = vmatpush1.xpose.msra.mxu0 0.0
  %78 = vmatprep.subr.mxu0 0.0
  %79 = vmatpush1.xpose.msra.mxu0 0.0
  %80 = vmatprep.subr.mxu0 0.0
  %81 = vmatpush1.xpose.msra.mxu0 0.0
  %82 = vmatprep.subr.mxu0 0.0
  %83 = vmatpush1.xpose.msra.mxu0 0.0
  %84 = vmatprep.subr.mxu0 0.0
  %85 = vmatpush1.xpose.msra.mxu0 0.0
  %86 = vmatprep.subr.mxu0 0.0
  %87 = vmatpush1.xpose.msra.mxu0 0.0
  %88 = vmatprep.subr.mxu0 0.0
  %89 = vmatpush1.xpose.msra.mxu0 0.0
  %90 = vmatprep.subr.mxu0 0.0
  %91 = vmatpush1.xpose.msra.mxu0 0.0
  %92 = vmatprep.subr.mxu0 0.0
  %93 = vmatpush1.xpose.msra.mxu0 0.0
  %94 = vmatprep.subr.mxu0 0.0
  %95 = vmatpush1.xpose.msra.mxu0 0.0
  %96 = vmatprep.subr.mxu0 0.0
  %97 = vmatpush1.xpose.msra.mxu0 0.0
  %98 = vmatprep.subr.mxu0 0.0
  %99 = vmatpush1.xpose.msra.mxu0 0.0
  %100 = vmatprep.subr.mxu0 0.0
  %101 = vmatpush1.xpose.msra.mxu0 0.0
  %102 = vmatprep.subr.mxu0 0.0
  %103 = vmatpush1.xpose.msra.mxu0 0.0
  %104 = vmatprep.subr.mxu0 0.0
  %105 = vmatpush1.xpose.msra.mxu0 0.0
  %106 = vmatprep.subr.mxu0 0.0
  %107 = vmatpush1.xpose.msra.mxu0 0.0
  %108 = vmatprep.subr.mxu0 0.0
  %109 = vmatpush1.xpose.msra.mxu0 0.0
  %110 = vmatprep.subr.mxu0 0.0
  %111 = vmatpush1.xpose.msra.mxu0 0.0
  %112 = vmatprep.subr.mxu0 0.0
  %113 = vmatpush1.xpose.msra.mxu0 0.0
  %114 = vmatprep.subr.mxu0 0.0
  %115 = vmatpush1.xpose.msra.mxu0 0.0
  %116 = vmatprep.subr.mxu0 0.0
  %117 = vmatpush1.xpose.msra.mxu0 0.0
  %118 = vmatprep.subr.mxu0 0.0
  %119 = vmatpush1.xpose.msra.mxu0 0.0
  %120 = vmatprep.subr.mxu0 0.0
  %121 = vmatpush1.xpose.msra.mxu0 0.0
  %122 = vmatprep.subr.mxu0 0.0
  %123 = vmatpush1.xpose.msra.mxu0 0.0
  %124 = vmatprep.subr.mxu0 0.0
  %125 = vmatpush1.xpose.msra.mxu0 0.0
  %126 = vmatprep.subr.mxu0 0.0
  %127 = vmatpush1.xpose.msra.mxu0 0.0
  %128 = vmatprep.subr.mxu0 0.0
  %129 = vmatpush1.xpose.msra.mxu0 0.0
  %130 = vmatprep.subr.mxu0 0.0
  %131 = vmatpush1.xpose.msra.mxu0 0.0
  %132 = vmatprep.mubr.f32.mxu0 %v30
  %133 = vmatmul.mubr.f32.gmra.mrb[0].mxu0 %v18
  %v134 = vpop.f32.mrb[0].mxu0
  %v135 = vadd.f32 0.0, %v134
  %v136 = vpop.f32.mrb[0].mxu0
  %137 = vdwg.mxu0
  %138 = vmatprep.subr.mxu0 %v31
  %139 = vmatpush1.xpose.msra.mxu0 %v19
  %140 = vmatprep.subr.mxu0 0.0
  %141 = vmatpush1.xpose.msra.mxu0 0.0
  %142 = vmatprep.subr.mxu0 0.0
  %143 = vmatpush1.xpose.msra.mxu0 0.0
  %144 = vmatprep.subr.mxu0 0.0
  %145 = vmatpush1.xpose.msra.mxu0 0.0
  %146 = vmatprep.subr.mxu0 0.0
  %147 = vmatpush1.xpose.msra.mxu0 0.0
  %148 = vmatprep.subr.mxu0 0.0
  %149 = vmatpush1.xpose.msra.mxu0 0.0
  %150 = vmatprep.subr.mxu0 0.0
  %151 = vmatpush1.xpose.msra.mxu0 0.0
  %152 = vmatprep.subr.mxu0 0.0
  %153 = vmatpush1.xpose.msra.mxu0 0.0
  %154 = vmatprep.subr.mxu0 0.0
  %155 = vmatpush1.xpose.msra.mxu0 0.0
  %156 = vmatprep.subr.mxu0 0.0
  %157 = vmatpush1.xpose.msra.mxu0 0.0
  %158 = vmatprep.subr.mxu0 0.0
  %159 = vmatpush1.xpose.msra.mxu0 0.0
  %160 = vmatprep.subr.mxu0 0.0
  %161 = vmatpush1.xpose.msra.mxu0 0.0
  %162 = vmatprep.subr.mxu0 0.0
  %163 = vmatpush1.xpose.msra.mxu0 0.0
  %164 = vmatprep.subr.mxu0 0.0
  %165 = vmatpush1.xpose.msra.mxu0 0.0
  %166 = vmatprep.subr.mxu0 0.0
  %167 = vmatpush1.xpose.msra.mxu0 0.0
  %168 = vmatprep.subr.mxu0 0.0
  %169 = vmatpush1.xpose.msra.mxu0 0.0
  %170 = vmatprep.subr.mxu0 0.0
  %171 = vmatpush1.xpose.msra.mxu0 0.0
  %172 = vmatprep.subr.mxu0 0.0
  %173 = vmatpush1.xpose.msra.mxu0 0.0
  %174 = vmatprep.subr.mxu0 0.0
  %175 = vmatpush1.xpose.msra.mxu0 0.0
  %176 = vmatprep.subr.mxu0 0.0
  %177 = vmatpush1.xpose.msra.mxu0 0.0
  %178 = vmatprep.subr.mxu0 0.0
  %179 = vmatpush1.xpose.msra.mxu0 0.0
  %180 = vmatprep.subr.mxu0 0.0
  %181 = vmatpush1.xpose.msra.mxu0 0.0
  %182 = vmatprep.subr.mxu0 0.0
  %183 = vmatpush1.xpose.msra.mxu0 0.0
  %184 = vmatprep.subr.mxu0 0.0
  %185 = vmatpush1.xpose.msra.mxu0 0.0
  %186 = vmatprep.subr.mxu0 0.0
  %187 = vmatpush1.xpose.msra.mxu0 0.0
  %188 = vmatprep.subr.mxu0 0.0
  %189 = vmatpush1.xpose.msra.mxu0 0.0
  %190 = vmatprep.subr.mxu0 0.0
  %191 = vmatpush1.xpose.msra.mxu0 0.0
  %192 = vmatprep.subr.mxu0 0.0
  %193 = vmatpush1.xpose.msra.mxu0 0.0
  %194 = vmatprep.subr.mxu0 0.0
  %195 = vmatpush1.xpose.msra.mxu0 0.0
  %196 = vmatprep.subr.mxu0 0.0
  %197 = vmatpush1.xpose.msra.mxu0 0.0
  %198 = vmatprep.subr.mxu0 0.0
  %199 = vmatpush1.xpose.msra.mxu0 0.0
  %200 = vmatprep.subr.mxu0 0.0
  %201 = vmatpush1.xpose.msra.mxu0 0.0
  %202 = vmatprep.mubr.f32.mxu0 %v31
  %203 = vmatmul.mubr.f32.gmra.mrb[0].mxu0 %v19
  %v204 = vpop.f32.mrb[0].mxu0
  %v205 = vadd.f32 %v135, %v204
  %v206 = vpop.f32.mrb[0].mxu0
  %207 = vdwg.mxu0
  %208 = vmatprep.subr.mxu0 %v32
  %209 = vmatpush1.xpose.msra.mxu0 %v20
  %210 = vmatprep.subr.mxu0 0.0
  %211 = vmatpush1.xpose.msra.mxu0 0.0
  %212 = vmatprep.subr.mxu0 0.0
  %213 = vmatpush1.xpose.msra.mxu0 0.0
  %214 = vmatprep.subr.mxu0 0.0
  %215 = vmatpush1.xpose.msra.mxu0 0.0
  %216 = vmatprep.subr.mxu0 0.0
  %217 = vmatpush1.xpose.msra.mxu0 0.0
  %218 = vmatprep.subr.mxu0 0.0
  %219 = vmatpush1.xpose.msra.mxu0 0.0
  %220 = vmatprep.subr.mxu0 0.0
  %221 = vmatpush1.xpose.msra.mxu0 0.0
  %222 = vmatprep.subr.mxu0 0.0
  %223 = vmatpush1.xpose.msra.mxu0 0.0
  %224 = vmatprep.subr.mxu0 0.0
  %225 = vmatpush1.xpose.msra.mxu0 0.0
  %226 = vmatprep.subr.mxu0 0.0
  %227 = vmatpush1.xpose.msra.mxu0 0.0
  %228 = vmatprep.subr.mxu0 0.0
  %229 = vmatpush1.xpose.msra.mxu0 0.0
  %230 = vmatprep.subr.mxu0 0.0
  %231 = vmatpush1.xpose.msra.mxu0 0.0
  %232 = vmatprep.subr.mxu0 0.0
  %233 = vmatpush1.xpose.msra.mxu0 0.0
  %234 = vmatprep.subr.mxu0 0.0
  %235 = vmatpush1.xpose.msra.mxu0 0.0
  %236 = vmatprep.subr.mxu0 0.0
  %237 = vmatpush1.xpose.msra.mxu0 0.0
  %238 = vmatprep.subr.mxu0 0.0
  %239 = vmatpush1.xpose.msra.mxu0 0.0
  %240 = vmatprep.subr.mxu0 0.0
  %241 = vmatpush1.xpose.msra.mxu0 0.0
  %242 = vmatprep.subr.mxu0 0.0
  %243 = vmatpush1.xpose.msra.mxu0 0.0
  %244 = vmatprep.subr.mxu0 0.0
  %245 = vmatpush1.xpose.msra.mxu0 0.0
  %246 = vmatprep.subr.mxu0 0.0
  %247 = vmatpush1.xpose.msra.mxu0 0.0
  %248 = vmatprep.subr.mxu0 0.0
  %249 = vmatpush1.xpose.msra.mxu0 0.0
  %250 = vmatprep.subr.mxu0 0.0
  %251 = vmatpush1.xpose.msra.mxu0 0.0
  %252 = vmatprep.subr.mxu0 0.0
  %253 = vmatpush1.xpose.msra.mxu0 0.0
  %254 = vmatprep.subr.mxu0 0.0
  %255 = vmatpush1.xpose.msra.mxu0 0.0
  %256 = vmatprep.subr.mxu0 0.0
  %257 = vmatpush1.xpose.msra.mxu0 0.0
  %258 = vmatprep.subr.mxu0 0.0
  %259 = vmatpush1.xpose.msra.mxu0 0.0
  %260 = vmatprep.subr.mxu0 0.0
  %261 = vmatpush1.xpose.msra.mxu0 0.0
  %262 = vmatprep.subr.mxu0 0.0
  %263 = vmatpush1.xpose.msra.mxu0 0.0
  %264 = vmatprep.subr.mxu0 0.0
  %265 = vmatpush1.xpose.msra.mxu0 0.0
  %266 = vmatprep.subr.mxu0 0.0
  %267 = vmatpush1.xpose.msra.mxu0 0.0
  %268 = vmatprep.subr.mxu0 0.0
  %269 = vmatpush1.xpose.msra.mxu0 0.0
  %270 = vmatprep.subr.mxu0 0.0
  %271 = vmatpush1.xpose.msra.mxu0 0.0
  %272 = vmatprep.mubr.f32.mxu0 %v32
  %273 = vmatmul.mubr.f32.gmra.mrb[0].mxu0 %v20
  %v274 = vpop.f32.mrb[0].mxu0
  %v275 = vadd.f32 %v205, %v274
  %v276 = vpop.f32.mrb[0].mxu0
  %277 = vdwg.mxu0
  %278 = vmatprep.subr.mxu0 %v33
  %279 = vmatpush1.xpose.msra.mxu0 %v21
  %280 = vmatprep.subr.mxu0 0.0
  %281 = vmatpush1.xpose.msra.mxu0 0.0
  %282 = vmatprep.subr.mxu0 0.0
  %283 = vmatpush1.xpose.msra.mxu0 0.0
  %284 = vmatprep.subr.mxu0 0.0
  %285 = vmatpush1.xpose.msra.mxu0 0.0
  %286 = vmatprep.subr.mxu0 0.0
  %287 = vmatpush1.xpose.msra.mxu0 0.0
  %288 = vmatprep.subr.mxu0 0.0
  %289 = vmatpush1.xpose.msra.mxu0 0.0
  %290 = vmatprep.subr.mxu0 0.0
  %291 = vmatpush1.xpose.msra.mxu0 0.0
  %292 = vmatprep.subr.mxu0 0.0
  %293 = vmatpush1.xpose.msra.mxu0 0.0
  %294 = vmatprep.subr.mxu0 0.0
  %295 = vmatpush1.xpose.msra.mxu0 0.0
  %296 = vmatprep.subr.mxu0 0.0
  %297 = vmatpush1.xpose.msra.mxu0 0.0
  %298 = vmatprep.subr.mxu0 0.0
  %299 = vmatpush1.xpose.msra.mxu0 0.0
  %300 = vmatprep.subr.mxu0 0.0
  %301 = vmatpush1.xpose.msra.mxu0 0.0
  %302 = vmatprep.subr.mxu0 0.0
  %303 = vmatpush1.xpose.msra.mxu0 0.0
  %304 = vmatprep.subr.mxu0 0.0
  %305 = vmatpush1.xpose.msra.mxu0 0.0
  %306 = vmatprep.subr.mxu0 0.0
  %307 = vmatpush1.xpose.msra.mxu0 0.0
  %308 = vmatprep.subr.mxu0 0.0
  %309 = vmatpush1.xpose.msra.mxu0 0.0
  %310 = vmatprep.subr.mxu0 0.0
  %311 = vmatpush1.xpose.msra.mxu0 0.0
  %312 = vmatprep.subr.mxu0 0.0
  %313 = vmatpush1.xpose.msra.mxu0 0.0
  %314 = vmatprep.subr.mxu0 0.0
  %315 = vmatpush1.xpose.msra.mxu0 0.0
  %316 = vmatprep.subr.mxu0 0.0
  %317 = vmatpush1.xpose.msra.mxu0 0.0
  %318 = vmatprep.subr.mxu0 0.0
  %319 = vmatpush1.xpose.msra.mxu0 0.0
  %320 = vmatprep.subr.mxu0 0.0
  %321 = vmatpush1.xpose.msra.mxu0 0.0
  %322 = vmatprep.subr.mxu0 0.0
  %323 = vmatpush1.xpose.msra.mxu0 0.0
  %324 = vmatprep.subr.mxu0 0.0
  %325 = vmatpush1.xpose.msra.mxu0 0.0
  %326 = vmatprep.subr.mxu0 0.0
  %327 = vmatpush1.xpose.msra.mxu0 0.0
  %328 = vmatprep.subr.mxu0 0.0
  %329 = vmatpush1.xpose.msra.mxu0 0.0
  %330 = vmatprep.subr.mxu0 0.0
  %331 = vmatpush1.xpose.msra.mxu0 0.0
  %332 = vmatprep.subr.mxu0 0.0
  %333 = vmatpush1.xpose.msra.mxu0 0.0
  %334 = vmatprep.subr.mxu0 0.0
  %335 = vmatpush1.xpose.msra.mxu0 0.0
  %336 = vmatprep.subr.mxu0 0.0
  %337 = vmatpush1.xpose.msra.mxu0 0.0
  %338 = vmatprep.subr.mxu0 0.0
  %339 = vmatpush1.xpose.msra.mxu0 0.0
  %340 = vmatprep.subr.mxu0 0.0
  %341 = vmatpush1.xpose.msra.mxu0 0.0
  %342 = vmatprep.mubr.f32.mxu0 %v33
  %343 = vmatmul.mubr.f32.gmra.mrb[0].mxu0 %v21
  %v344 = vpop.f32.mrb[0].mxu0
  %v345 = vadd.f32 %v275, %v344
  %v346 = vpop.f32.mrb[0].mxu0
  %347 = vdwg.mxu0
  %348 = vmatprep.subr.mxu0 %v34
  %349 = vmatpush1.xpose.msra.mxu0 %v22
  %350 = vmatprep.subr.mxu0 0.0
  %351 = vmatpush1.xpose.msra.mxu0 0.0
  %352 = vmatprep.subr.mxu0 0.0
  %353 = vmatpush1.xpose.msra.mxu0 0.0
  %354 = vmatprep.subr.mxu0 0.0
  %355 = vmatpush1.xpose.msra.mxu0 0.0
  %356 = vmatprep.subr.mxu0 0.0
  %357 = vmatpush1.xpose.msra.mxu0 0.0
  %358 = vmatprep.subr.mxu0 0.0
  %359 = vmatpush1.xpose.msra.mxu0 0.0
  %360 = vmatprep.subr.mxu0 0.0
  %361 = vmatpush1.xpose.msra.mxu0 0.0
  %362 = vmatprep.subr.mxu0 0.0
  %363 = vmatpush1.xpose.msra.mxu0 0.0
  %364 = vmatprep.subr.mxu0 0.0
  %365 = vmatpush1.xpose.msra.mxu0 0.0
  %366 = vmatprep.subr.mxu0 0.0
  %367 = vmatpush1.xpose.msra.mxu0 0.0
  %368 = vmatprep.subr.mxu0 0.0
  %369 = vmatpush1.xpose.msra.mxu0 0.0
  %370 = vmatprep.subr.mxu0 0.0
  %371 = vmatpush1.xpose.msra.mxu0 0.0
  %372 = vmatprep.subr.mxu0 0.0
  %373 = vmatpush1.xpose.msra.mxu0 0.0
  %374 = vmatprep.subr.mxu0 0.0
  %375 = vmatpush1.xpose.msra.mxu0 0.0
  %376 = vmatprep.subr.mxu0 0.0
  %377 = vmatpush1.xpose.msra.mxu0 0.0
  %378 = vmatprep.subr.mxu0 0.0
  %379 = vmatpush1.xpose.msra.mxu0 0.0
  %380 = vmatprep.subr.mxu0 0.0
  %381 = vmatpush1.xpose.msra.mxu0 0.0
  %382 = vmatprep.subr.mxu0 0.0
  %383 = vmatpush1.xpose.msra.mxu0 0.0
  %384 = vmatprep.subr.mxu0 0.0
  %385 = vmatpush1.xpose.msra.mxu0 0.0
  %386 = vmatprep.subr.mxu0 0.0
  %387 = vmatpush1.xpose.msra.mxu0 0.0
  %388 = vmatprep.subr.mxu0 0.0
  %389 = vmatpush1.xpose.msra.mxu0 0.0
  %390 = vmatprep.subr.mxu0 0.0
  %391 = vmatpush1.xpose.msra.mxu0 0.0
  %392 = vmatprep.subr.mxu0 0.0
  %393 = vmatpush1.xpose.msra.mxu0 0.0
  %394 = vmatprep.subr.mxu0 0.0
  %395 = vmatpush1.xpose.msra.mxu0 0.0
  %396 = vmatprep.subr.mxu0 0.0
  %397 = vmatpush1.xpose.msra.mxu0 0.0
  %398 = vmatprep.subr.mxu0 0.0
  %399 = vmatpush1.xpose.msra.mxu0 0.0
  %400 = vmatprep.subr.mxu0 0.0
  %401 = vmatpush1.xpose.msra.mxu0 0.0
  %402 = vmatprep.subr.mxu0 0.0
  %403 = vmatpush1.xpose.msra.mxu0 0.0
  %404 = vmatprep.subr.mxu0 0.0
  %405 = vmatpush1.xpose.msra.mxu0 0.0
  %406 = vmatprep.subr.mxu0 0.0
  %407 = vmatpush1.xpose.msra.mxu0 0.0
  %408 = vmatprep.subr.mxu0 0.0
  %409 = vmatpush1.xpose.msra.mxu0 0.0
  %410 = vmatprep.subr.mxu0 0.0
  %411 = vmatpush1.xpose.msra.mxu0 0.0
  %412 = vmatprep.mubr.f32.mxu0 %v34
  %413 = vmatmul.mubr.f32.gmra.mrb[0].mxu0 %v22
  %v414 = vpop.f32.mrb[0].mxu0
  %v415 = vadd.f32 %v345, %v414
  %v416 = vpop.f32.mrb[0].mxu0
  %417 = vdwg.mxu0
  %418 = vmatprep.subr.mxu0 0.0
  %419 = vmatpush1.xpose.msra.mxu0 %v23
  %420 = vmatprep.subr.mxu0 0.0
  %421 = vmatpush1.xpose.msra.mxu0 0.0
  %422 = vmatprep.subr.mxu0 0.0
  %423 = vmatpush1.xpose.msra.mxu0 0.0
  %424 = vmatprep.subr.mxu0 0.0
  %425 = vmatpush1.xpose.msra.mxu0 0.0
  %426 = vmatprep.subr.mxu0 0.0
  %427 = vmatpush1.xpose.msra.mxu0 0.0
  %428 = vmatprep.subr.mxu0 0.0
  %429 = vmatpush1.xpose.msra.mxu0 0.0
  %430 = vmatprep.subr.mxu0 0.0
  %431 = vmatpush1.xpose.msra.mxu0 0.0
  %432 = vmatprep.subr.mxu0 0.0
  %433 = vmatpush1.xpose.msra.mxu0 0.0
  %434 = vmatprep.subr.mxu0 0.0
  %435 = vmatpush1.xpose.msra.mxu0 0.0
  %436 = vmatprep.subr.mxu0 0.0
  %437 = vmatpush1.xpose.msra.mxu0 0.0
  %438 = vmatprep.subr.mxu0 0.0
  %439 = vmatpush1.xpose.msra.mxu0 0.0
  %440 = vmatprep.subr.mxu0 0.0
  %441 = vmatpush1.xpose.msra.mxu0 0.0
  %442 = vmatprep.subr.mxu0 0.0
  %443 = vmatpush1.xpose.msra.mxu0 0.0
  %444 = vmatprep.subr.mxu0 0.0
  %445 = vmatpush1.xpose.msra.mxu0 0.0
  %446 = vmatprep.subr.mxu0 0.0
  %447 = vmatpush1.xpose.msra.mxu0 0.0
  %448 = vmatprep.subr.mxu0 0.0
  %449 = vmatpush1.xpose.msra.mxu0 0.0
  %450 = vmatprep.subr.mxu0 0.0
  %451 = vmatpush1.xpose.msra.mxu0 0.0
  %452 = vmatprep.subr.mxu0 0.0
  %453 = vmatpush1.xpose.msra.mxu0 0.0
  %454 = vmatprep.subr.mxu0 0.0
  %455 = vmatpush1.xpose.msra.mxu0 0.0
  %456 = vmatprep.subr.mxu0 0.0
  %457 = vmatpush1.xpose.msra.mxu0 0.0
  %458 = vmatprep.subr.mxu0 0.0
  %459 = vmatpush1.xpose.msra.mxu0 0.0
  %460 = vmatprep.subr.mxu0 0.0
  %461 = vmatpush1.xpose.msra.mxu0 0.0
  %462 = vmatprep.subr.mxu0 0.0
  %463 = vmatpush1.xpose.msra.mxu0 0.0
  %464 = vmatprep.subr.mxu0 0.0
  %465 = vmatpush1.xpose.msra.mxu0 0.0
  %466 = vmatprep.subr.mxu0 0.0
  %467 = vmatpush1.xpose.msra.mxu0 0.0
  %468 = vmatprep.subr.mxu0 0.0
  %469 = vmatpush1.xpose.msra.mxu0 0.0
  %470 = vmatprep.subr.mxu0 0.0
  %471 = vmatpush1.xpose.msra.mxu0 0.0
  %472 = vmatprep.subr.mxu0 0.0
  %473 = vmatpush1.xpose.msra.mxu0 0.0
  %474 = vmatprep.subr.mxu0 0.0
  %475 = vmatpush1.xpose.msra.mxu0 0.0
  %476 = vmatprep.subr.mxu0 0.0
  %477 = vmatpush1.xpose.msra.mxu0 0.0
  %478 = vmatprep.subr.mxu0 0.0
  %479 = vmatpush1.xpose.msra.mxu0 0.0
  %480 = vmatprep.subr.mxu0 0.0
  %481 = vmatpush1.xpose.msra.mxu0 0.0
  %482 = vmatprep.mubr.f32.mxu0 0.0
  %483 = vmatmul.mubr.f32.gmra.mrb[0].mxu0 %v23
  %v484 = vpop.f32.mrb[0].mxu0
  %v485 = vadd.f32 %v415, %v484
  %v486 = vpop.f32.mrb[0].mxu0
  %487 = vdwg.mxu0
  %v488 = vadd.f32 %v67, %v485
  %vm489 = vcmask 18432
  %490 = vst.msk [vmem:[%s2] sm:$0x7] %vm489, %v488
  // Predicated region
  $region10: #{model_forward.2} parent=0 // pred_check
    _
  $region11: #{model_forward.2} parent=0 // pred_check_branch
    %492 = sbr.rel (0) target = $region13
  $region12: #{model_forward.2} parent=0 // pred_region
    _
  $region13: #{model_forward.2} parent=0 // pred_fallthru
    _
  // Predicated region
  $region14: #{model_forward.2} parent=0 // pred_check
    _
  $region15: #{model_forward.2} parent=0 // pred_check_branch
    %494 = sbr.rel (0) target = $region17
  $region16: #{model_forward.2} parent=0 // pred_region
    _
  $region17: #{model_forward.2} parent=0 // pred_fallthru
    _
  // Predicated region
  $region18: #{model_forward.2} parent=0 // pred_check
    _
  $region19: #{model_forward.2} parent=0 // pred_check_branch
    %496 = sbr.rel (0) target = $region21
  $region20: #{model_forward.2} parent=0 // pred_region
    _
  $region21: #{model_forward.2} parent=0 // pred_fallthru
    _
  // Predicated region
  $region22: #{model_forward.2} parent=0 // pred_check
    _
  $region23: #{model_forward.2} parent=0 // pred_check_branch
    %498 = sbr.rel (0) target = $region25
  $region24: #{model_forward.2} parent=0 // pred_region
    _
  $region25: #{model_forward.2} parent=0 // pred_fallthru
    _

// kernel: model_forward.3
$region0: #{model_forward.3}
  #allocation0 [shape = 'u32[]', space=smem, size = 0x4, offset = 0x4, fixed_abs, tag = 'smem constant byte address 0x4 - core index']
  #allocation1 [shape = 'u32[144,128]{1,0:T(1,128)}', space=vmem, size = 0x12000, scoped, tag = 'internal scratch']
  %s0 = inlined_call_operand.vmem [shape: f32[3,1408], index: 0, kind: input, shape index: {}]
  %s1 = inlined_call_operand.vmem [shape: f32[32,3], index: 1, kind: input, shape index: {}]
  %s2 = inlined_call_operand.vmem [shape: f32[32,1], index: 2, kind: input, shape index: {}]
  %s3 = inlined_call_operand.vmem [shape: f32[32,1408], index: 3, kind: output, shape index: {}]
  %s4 = sld [smem:[#allocation0]]
  $region22: #{model_forward.3} parent=0
    _
  %s6 = ssub.s32 1, %s4
  %s7 = scalar_select 0, %s6, %s4
  // Predicated region
  $region2: #{model_forward.3} parent=0 // pred_check
    _
  $region3: #{model_forward.3} parent=0 // pred_check_branch
    %9 = sbr.rel (0) target = $region5
  $region4: #{model_forward.3} parent=0 // pred_region
    _
  $region5: #{model_forward.3} parent=0 // pred_fallthru
    _
  // Predicated region
  $region6: #{model_forward.3} parent=0 // pred_check
    _
  $region7: #{model_forward.3} parent=0 // pred_check_branch
    %11 = sbr.rel (0) target = $region9
  $region8: #{model_forward.3} parent=0 // pred_region
    _
  $region9: #{model_forward.3} parent=0 // pred_fallthru
    _
  // Predicated region
  $region10: #{model_forward.3} parent=0 // pred_check
    _
  $region11: #{model_forward.3} parent=0 // pred_check_branch
    %13 = sbr.rel (0) target = $region13
  $region12: #{model_forward.3} parent=0 // pred_region
    _
  $region13: #{model_forward.3} parent=0 // pred_fallthru
    _
  %v14 = vld [vmem:[%s1] sm:$0xff]
  %v15 = vld [vmem:[%s1 + $0x8] sm:$0xff]
  %v16 = vld [vmem:[%s1 + $0x10] sm:$0xff]
  %v17 = vld [vmem:[%s1 + $0x18] sm:$0xff]
  %v18 = vld [vmem:[%s0] sm:$0x77]
  %v19 = vld [vmem:[%s0 + $0x8] sm:$0x77]
  %v20 = vld [vmem:[%s0 + $0x10] sm:$0x77]
  %v21 = vld [vmem:[%s0 + $0x18] sm:$0x77]
  %v22 = vld [vmem:[%s0 + $0x20] sm:$0x77]
  %v23 = vld [vmem:[%s0 + $0x28] sm:$0x7]
  %v24 = vld [vmem:[%s2] sm:$0xff]
  %v25 = vld [vmem:[%s2 + $0x8] sm:$0xff]
  %v26 = vld [vmem:[%s2 + $0x10] sm:$0xff]
  %v27 = vld [vmem:[%s2 + $0x18] sm:$0xff]
  %29 = vset.pattern.permute.xlu0 0
  %30 = vperm.xlu0 %29, %v24
  %v31 = vpop.permute.xlu0 %30
  %34 = vset.pattern.permute.xlu0 0
  %35 = vperm.xlu0 %34, %v25
  %v36 = vpop.permute.xlu0 %35
  %39 = vset.pattern.permute.xlu0 0
  %40 = vperm.xlu0 %39, %v26
  %v41 = vpop.permute.xlu0 %40
  %44 = vset.pattern.permute.xlu0 0
  %45 = vperm.xlu0 %44, %v27
  %v46 = vpop.permute.xlu0 %45
  %v54 = vcombine.high %v18, %v18
  %v55 = vcombine.high %v19, %v19
  %v56 = vcombine.high %v20, %v20
  %v57 = vcombine.high %v21, %v21
  %v58 = vcombine.high %v22, %v22
  %vm59 = vcmask 23552
  %v61 = vsel %vm59, %v14, 0
  %v64 = vsel %vm59, %v15, 0
  %v67 = vsel %vm59, %v16, 0
  %v70 = vsel %vm59, %v17, 0
  %vm72 = vcmask 1042432
  %v73 = vsel %vm72, %v18, 0
  %v75 = vsel %vm72, %v54, 0
  %v77 = vsel %vm72, %v19, 0
  %v79 = vsel %vm72, %v55, 0
  %v81 = vsel %vm72, %v20, 0
  %v83 = vsel %vm72, %v56, 0
  %v85 = vsel %vm72, %v21, 0
  %v87 = vsel %vm72, %v57, 0
  %v89 = vsel %vm72, %v22, 0
  %v91 = vsel %vm72, %v58, 0
  %v93 = vsel %vm72, %v23, 0
  %95 = vmatprep.subr.mxu0 %v75
  %96 = vmatpush1.msra.mxu0 %v73
  %97 = vmatprep.subr.mxu0 0.0
  %98 = vmatpush1.msra.mxu0 0.0
  %99 = vmatprep.subr.mxu0 0.0
  %100 = vmatpush1.msra.mxu0 0.0
  %101 = vmatprep.subr.mxu0 0.0
  %102 = vmatpush1.msra.mxu0 0.0
  %103 = vmatprep.subr.mxu0 0.0
  %104 = vmatpush1.msra.mxu0 0.0
  %105 = vmatprep.subr.mxu0 0.0
  %106 = vmatpush1.msra.mxu0 0.0
  %107 = vmatprep.subr.mxu0 0.0
  %108 = vmatpush1.msra.mxu0 0.0
  %109 = vmatprep.subr.mxu0 0.0
  %110 = vmatpush1.msra.mxu0 0.0
  %111 = vmatprep.subr.mxu0 0.0
  %112 = vmatpush1.msra.mxu0 0.0
  %113 = vmatprep.subr.mxu0 0.0
  %114 = vmatpush1.msra.mxu0 0.0
  %115 = vmatprep.subr.mxu0 0.0
  %116 = vmatpush1.msra.mxu0 0.0
  %117 = vmatprep.subr.mxu0 0.0
  %118 = vmatpush1.msra.mxu0 0.0
  %119 = vmatprep.subr.mxu0 0.0
  %120 = vmatpush1.msra.mxu0 0.0
  %121 = vmatprep.subr.mxu0 0.0
  %122 = vmatpush1.msra.mxu0 0.0
  %123 = vmatprep.subr.mxu0 0.0
  %124 = vmatpush1.msra.mxu0 0.0
  %125 = vmatprep.subr.mxu0 0.0
  %126 = vmatpush1.msra.mxu0 0.0
  %127 = vmatprep.subr.mxu0 0.0
  %128 = vmatpush1.msra.mxu0 0.0
  %129 = vmatprep.subr.mxu0 0.0
  %130 = vmatpush1.msra.mxu0 0.0
  %131 = vmatprep.subr.mxu0 0.0
  %132 = vmatpush1.msra.mxu0 0.0
  %133 = vmatprep.subr.mxu0 0.0
  %134 = vmatpush1.msra.mxu0 0.0
  %135 = vmatprep.subr.mxu0 0.0
  %136 = vmatpush1.msra.mxu0 0.0
  %137 = vmatprep.subr.mxu0 0.0
  %138 = vmatpush1.msra.mxu0 0.0
  %139 = vmatprep.subr.mxu0 0.0
  %140 = vmatpush1.msra.mxu0 0.0
  %141 = vmatprep.subr.mxu0 0.0
  %142 = vmatpush1.msra.mxu0 0.0
  %143 = vmatprep.subr.mxu0 0.0
  %144 = vmatpush1.msra.mxu0 0.0
  %145 = vmatprep.subr.mxu0 0.0
  %146 = vmatpush1.msra.mxu0 0.0
  %147 = vmatprep.subr.mxu0 0.0
  %148 = vmatpush1.msra.mxu0 0.0
  %149 = vmatprep.subr.mxu0 0.0
  %150 = vmatpush1.msra.mxu0 0.0
  %151 = vmatprep.subr.mxu0 0.0
  %152 = vmatpush1.msra.mxu0 0.0
  %153 = vmatprep.subr.mxu0 0.0
  %154 = vmatpush1.msra.mxu0 0.0
  %155 = vmatprep.subr.mxu0 0.0
  %156 = vmatpush1.msra.mxu0 0.0
  %157 = vmatprep.subr.mxu0 0.0
  %158 = vmatpush1.msra.mxu0 0.0
  %159 = vmatprep.mubr.f32.mxu0 0.0
  %160 = vmatmul.mubr.f32.gmra.mrb[0].mxu0 %v61
  %v161 = vpop.f32.mrb[0].mxu0
  %v162 = vadd.f32 %v31, %v161
  %v163 = vpop.f32.mrb[0].mxu0
  %v164 = vadd.f32 %v31, %v163
  %165 = vmatprep.mubr.f32.mxu0 0.0
  %166 = vmatmul.mubr.f32.gmra.mrb[0].mxu0 %v64
  %v167 = vpop.f32.mrb[0].mxu0
  %v168 = vadd.f32 %v36, %v167
  %v169 = vpop.f32.mrb[0].mxu0
  %v170 = vadd.f32 %v36, %v169
  %171 = vmatprep.mubr.f32.mxu0 0.0
  %172 = vmatmul.mubr.f32.gmra.mrb[0].mxu0 %v67
  %v173 = vpop.f32.mrb[0].mxu0
  %v174 = vadd.f32 %v41, %v173
  %v175 = vpop.f32.mrb[0].mxu0
  %v176 = vadd.f32 %v41, %v175
  %177 = vmatprep.mubr.f32.mxu0 0.0
  %178 = vmatmul.mubr.f32.gmra.mrb[0].mxu0 %v70
  %v179 = vpop.f32.mrb[0].mxu0
  %v180 = vadd.f32 %v46, %v179
  %v181 = vpop.f32.mrb[0].mxu0
  %v182 = vadd.f32 %v46, %v181
  %183 = vdwg.mxu0
  %184 = vmatprep.subr.mxu0 %v79
  %185 = vmatpush1.msra.mxu0 %v77
  %186 = vmatprep.subr.mxu0 0.0
  %187 = vmatpush1.msra.mxu0 0.0
  %188 = vmatprep.subr.mxu0 0.0
  %189 = vmatpush1.msra.mxu0 0.0
  %190 = vmatprep.subr.mxu0 0.0
  %191 = vmatpush1.msra.mxu0 0.0
  %192 = vmatprep.subr.mxu0 0.0
  %193 = vmatpush1.msra.mxu0 0.0
  %194 = vmatprep.subr.mxu0 0.0
  %195 = vmatpush1.msra.mxu0 0.0
  %196 = vmatprep.subr.mxu0 0.0
  %197 = vmatpush1.msra.mxu0 0.0
  %198 = vmatprep.subr.mxu0 0.0
  %199 = vmatpush1.msra.mxu0 0.0
  %200 = vmatprep.subr.mxu0 0.0
  %201 = vmatpush1.msra.mxu0 0.0
  %202 = vmatprep.subr.mxu0 0.0
  %203 = vmatpush1.msra.mxu0 0.0
  %204 = vmatprep.subr.mxu0 0.0
  %205 = vmatpush1.msra.mxu0 0.0
  %206 = vmatprep.subr.mxu0 0.0
  %207 = vmatpush1.msra.mxu0 0.0
  %208 = vmatprep.subr.mxu0 0.0
  %209 = vmatpush1.msra.mxu0 0.0
  %210 = vmatprep.subr.mxu0 0.0
  %211 = vmatpush1.msra.mxu0 0.0
  %212 = vmatprep.subr.mxu0 0.0
  %213 = vmatpush1.msra.mxu0 0.0
  %214 = vmatprep.subr.mxu0 0.0
  %215 = vmatpush1.msra.mxu0 0.0
  %216 = vmatprep.subr.mxu0 0.0
  %217 = vmatpush1.msra.mxu0 0.0
  %218 = vmatprep.subr.mxu0 0.0
  %219 = vmatpush1.msra.mxu0 0.0
  %220 = vmatprep.subr.mxu0 0.0
  %221 = vmatpush1.msra.mxu0 0.0
  %222 = vmatprep.subr.mxu0 0.0
  %223 = vmatpush1.msra.mxu0 0.0
  %224 = vmatprep.subr.mxu0 0.0
  %225 = vmatpush1.msra.mxu0 0.0
  %226 = vmatprep.subr.mxu0 0.0
  %227 = vmatpush1.msra.mxu0 0.0
  %228 = vmatprep.subr.mxu0 0.0
  %229 = vmatpush1.msra.mxu0 0.0
  %230 = vmatprep.subr.mxu0 0.0
  %231 = vmatpush1.msra.mxu0 0.0
  %232 = vmatprep.subr.mxu0 0.0
  %233 = vmatpush1.msra.mxu0 0.0
  %234 = vmatprep.subr.mxu0 0.0
  %235 = vmatpush1.msra.mxu0 0.0
  %236 = vmatprep.subr.mxu0 0.0
  %237 = vmatpush1.msra.mxu0 0.0
  %238 = vmatprep.subr.mxu0 0.0
  %239 = vmatpush1.msra.mxu0 0.0
  %240 = vmatprep.subr.mxu0 0.0
  %241 = vmatpush1.msra.mxu0 0.0
  %242 = vmatprep.subr.mxu0 0.0
  %243 = vmatpush1.msra.mxu0 0.0
  %244 = vmatprep.subr.mxu0 0.0
  %245 = vmatpush1.msra.mxu0 0.0
  %246 = vmatprep.subr.mxu0 0.0
  %247 = vmatpush1.msra.mxu0 0.0
  %248 = vmatprep.mubr.f32.mxu0 0.0
  %249 = vmatmul.mubr.f32.gmra.mrb[0].mxu0 %v61
  %v250 = vpop.f32.mrb[0].mxu0
  %v251 = vadd.f32 %v31, %v250
  %v252 = vpop.f32.mrb[0].mxu0
  %v253 = vadd.f32 %v31, %v252
  %254 = vmatprep.mubr.f32.mxu0 0.0
  %255 = vmatmul.mubr.f32.gmra.mrb[0].mxu0 %v64
  %v256 = vpop.f32.mrb[0].mxu0
  %v257 = vadd.f32 %v36, %v256
  %v258 = vpop.f32.mrb[0].mxu0
  %v259 = vadd.f32 %v36, %v258
  %260 = vmatprep.mubr.f32.mxu0 0.0
  %261 = vmatmul.mubr.f32.gmra.mrb[0].mxu0 %v67
  %v262 = vpop.f32.mrb[0].mxu0
  %v263 = vadd.f32 %v41, %v262
  %v264 = vpop.f32.mrb[0].mxu0
  %v265 = vadd.f32 %v41, %v264
  %266 = vmatprep.mubr.f32.mxu0 0.0
  %267 = vmatmul.mubr.f32.gmra.mrb[0].mxu0 %v70
  %v268 = vpop.f32.mrb[0].mxu0
  %v269 = vadd.f32 %v46, %v268
  %v270 = vpop.f32.mrb[0].mxu0
  %v271 = vadd.f32 %v46, %v270
  %272 = vdwg.mxu0
  %273 = vmatprep.subr.mxu0 %v83
  %274 = vmatpush1.msra.mxu0 %v81
  %275 = vmatprep.subr.mxu0 0.0
  %276 = vmatpush1.msra.mxu0 0.0
  %277 = vmatprep.subr.mxu0 0.0
  %278 = vmatpush1.msra.mxu0 0.0
  %279 = vmatprep.subr.mxu0 0.0
  %280 = vmatpush1.msra.mxu0 0.0
  %281 = vmatprep.subr.mxu0 0.0
  %282 = vmatpush1.msra.mxu0 0.0
  %283 = vmatprep.subr.mxu0 0.0
  %284 = vmatpush1.msra.mxu0 0.0
  %285 = vmatprep.subr.mxu0 0.0
  %286 = vmatpush1.msra.mxu0 0.0
  %287 = vmatprep.subr.mxu0 0.0
  %288 = vmatpush1.msra.mxu0 0.0
  %289 = vmatprep.subr.mxu0 0.0
  %290 = vmatpush1.msra.mxu0 0.0
  %291 = vmatprep.subr.mxu0 0.0
  %292 = vmatpush1.msra.mxu0 0.0
  %293 = vmatprep.subr.mxu0 0.0
  %294 = vmatpush1.msra.mxu0 0.0
  %295 = vmatprep.subr.mxu0 0.0
  %296 = vmatpush1.msra.mxu0 0.0
  %297 = vmatprep.subr.mxu0 0.0
  %298 = vmatpush1.msra.mxu0 0.0
  %299 = vmatprep.subr.mxu0 0.0
  %300 = vmatpush1.msra.mxu0 0.0
  %301 = vmatprep.subr.mxu0 0.0
  %302 = vmatpush1.msra.mxu0 0.0
  %303 = vmatprep.subr.mxu0 0.0
  %304 = vmatpush1.msra.mxu0 0.0
  %305 = vmatprep.subr.mxu0 0.0
  %306 = vmatpush1.msra.mxu0 0.0
  %307 = vmatprep.subr.mxu0 0.0
  %308 = vmatpush1.msra.mxu0 0.0
  %309 = vmatprep.subr.mxu0 0.0
  %310 = vmatpush1.msra.mxu0 0.0
  %311 = vmatprep.subr.mxu0 0.0
  %312 = vmatpush1.msra.mxu0 0.0
  %313 = vmatprep.subr.mxu0 0.0
  %314 = vmatpush1.msra.mxu0 0.0
  %315 = vmatprep.subr.mxu0 0.0
  %316 = vmatpush1.msra.mxu0 0.0
  %317 = vmatprep.subr.mxu0 0.0
  %318 = vmatpush1.msra.mxu0 0.0
  %319 = vmatprep.subr.mxu0 0.0
  %320 = vmatpush1.msra.mxu0 0.0
  %321 = vmatprep.subr.mxu0 0.0
  %322 = vmatpush1.msra.mxu0 0.0
  %323 = vmatprep.subr.mxu0 0.0
  %324 = vmatpush1.msra.mxu0 0.0
  %325 = vmatprep.subr.mxu0 0.0
  %326 = vmatpush1.msra.mxu0 0.0
  %327 = vmatprep.subr.mxu0 0.0
  %328 = vmatpush1.msra.mxu0 0.0
  %329 = vmatprep.subr.mxu0 0.0
  %330 = vmatpush1.msra.mxu0 0.0
  %331 = vmatprep.subr.mxu0 0.0
  %332 = vmatpush1.msra.mxu0 0.0
  %333 = vmatprep.subr.mxu0 0.0
  %334 = vmatpush1.msra.mxu0 0.0
  %335 = vmatprep.subr.mxu0 0.0
  %336 = vmatpush1.msra.mxu0 0.0
  %337 = vmatprep.mubr.f32.mxu0 0.0
  %338 = vmatmul.mubr.f32.gmra.mrb[0].mxu0 %v61
  %v339 = vpop.f32.mrb[0].mxu0
  %v340 = vadd.f32 %v31, %v339
  %v341 = vpop.f32.mrb[0].mxu0
  %v342 = vadd.f32 %v31, %v341
  %343 = vmatprep.mubr.f32.mxu0 0.0
  %344 = vmatmul.mubr.f32.gmra.mrb[0].mxu0 %v64
  %v345 = vpop.f32.mrb[0].mxu0
  %v346 = vadd.f32 %v36, %v345
  %v347 = vpop.f32.mrb[0].mxu0
  %v348 = vadd.f32 %v36, %v347
  %349 = vmatprep.mubr.f32.mxu0 0.0
  %350 = vmatmul.mubr.f32.gmra.mrb[0].mxu0 %v67
  %v351 = vpop.f32.mrb[0].mxu0
  %v352 = vadd.f32 %v41, %v351
  %v353 = vpop.f32.mrb[0].mxu0
  %v354 = vadd.f32 %v41, %v353
  %355 = vmatprep.mubr.f32.mxu0 0.0
  %356 = vmatmul.mubr.f32.gmra.mrb[0].mxu0 %v70
  %v357 = vpop.f32.mrb[0].mxu0
  %v358 = vadd.f32 %v46, %v357
  %v359 = vpop.f32.mrb[0].mxu0
  %v360 = vadd.f32 %v46, %v359
  %361 = vdwg.mxu0
  %362 = vmatprep.subr.mxu0 %v87
  %363 = vmatpush1.msra.mxu0 %v85
  %364 = vmatprep.subr.mxu0 0.0
  %365 = vmatpush1.msra.mxu0 0.0
  %366 = vmatprep.subr.mxu0 0.0
  %367 = vmatpush1.msra.mxu0 0.0
  %368 = vmatprep.subr.mxu0 0.0
  %369 = vmatpush1.msra.mxu0 0.0
  %370 = vmatprep.subr.mxu0 0.0
  %371 = vmatpush1.msra.mxu0 0.0
  %372 = vmatprep.subr.mxu0 0.0
  %373 = vmatpush1.msra.mxu0 0.0
  %374 = vmatprep.subr.mxu0 0.0
  %375 = vmatpush1.msra.mxu0 0.0
  %376 = vmatprep.subr.mxu0 0.0
  %377 = vmatpush1.msra.mxu0 0.0
  %378 = vmatprep.subr.mxu0 0.0
  %379 = vmatpush1.msra.mxu0 0.0
  %380 = vmatprep.subr.mxu0 0.0
  %381 = vmatpush1.msra.mxu0 0.0
  %382 = vmatprep.subr.mxu0 0.0
  %383 = vmatpush1.msra.mxu0 0.0
  %384 = vmatprep.subr.mxu0 0.0
  %385 = vmatpush1.msra.mxu0 0.0
  %386 = vmatprep.subr.mxu0 0.0
  %387 = vmatpush1.msra.mxu0 0.0
  %388 = vmatprep.subr.mxu0 0.0
  %389 = vmatpush1.msra.mxu0 0.0
  %390 = vmatprep.subr.mxu0 0.0
  %391 = vmatpush1.msra.mxu0 0.0
  %392 = vmatprep.subr.mxu0 0.0
  %393 = vmatpush1.msra.mxu0 0.0
  %394 = vmatprep.subr.mxu0 0.0
  %395 = vmatpush1.msra.mxu0 0.0
  %396 = vmatprep.subr.mxu0 0.0
  %397 = vmatpush1.msra.mxu0 0.0
  %398 = vmatprep.subr.mxu0 0.0
  %399 = vmatpush1.msra.mxu0 0.0
  %400 = vmatprep.subr.mxu0 0.0
  %401 = vmatpush1.msra.mxu0 0.0
  %402 = vmatprep.subr.mxu0 0.0
  %403 = vmatpush1.msra.mxu0 0.0
  %404 = vmatprep.subr.mxu0 0.0
  %405 = vmatpush1.msra.mxu0 0.0
  %406 = vmatprep.subr.mxu0 0.0
  %407 = vmatpush1.msra.mxu0 0.0
  %408 = vmatprep.subr.mxu0 0.0
  %409 = vmatpush1.msra.mxu0 0.0
  %410 = vmatprep.subr.mxu0 0.0
  %411 = vmatpush1.msra.mxu0 0.0
  %412 = vmatprep.subr.mxu0 0.0
  %413 = vmatpush1.msra.mxu0 0.0
  %414 = vmatprep.subr.mxu0 0.0
  %415 = vmatpush1.msra.mxu0 0.0
  %416 = vmatprep.subr.mxu0 0.0
  %417 = vmatpush1.msra.mxu0 0.0
  %418 = vmatprep.subr.mxu0 0.0
  %419 = vmatpush1.msra.mxu0 0.0
  %420 = vmatprep.subr.mxu0 0.0
  %421 = vmatpush1.msra.mxu0 0.0
  %422 = vmatprep.subr.mxu0 0.0
  %423 = vmatpush1.msra.mxu0 0.0
  %424 = vmatprep.subr.mxu0 0.0
  %425 = vmatpush1.msra.mxu0 0.0
  %426 = vmatprep.mubr.f32.mxu0 0.0
  %427 = vmatmul.mubr.f32.gmra.mrb[0].mxu0 %v61
  %v428 = vpop.f32.mrb[0].mxu0
  %v429 = vadd.f32 %v31, %v428
  %v430 = vpop.f32.mrb[0].mxu0
  %v431 = vadd.f32 %v31, %v430
  %432 = vmatprep.mubr.f32.mxu0 0.0
  %433 = vmatmul.mubr.f32.gmra.mrb[0].mxu0 %v64
  %v434 = vpop.f32.mrb[0].mxu0
  %v435 = vadd.f32 %v36, %v434
  %v436 = vpop.f32.mrb[0].mxu0
  %v437 = vadd.f32 %v36, %v436
  %438 = vmatprep.mubr.f32.mxu0 0.0
  %439 = vmatmul.mubr.f32.gmra.mrb[0].mxu0 %v67
  %v440 = vpop.f32.mrb[0].mxu0
  %v441 = vadd.f32 %v41, %v440
  %v442 = vpop.f32.mrb[0].mxu0
  %v443 = vadd.f32 %v41, %v442
  %444 = vmatprep.mubr.f32.mxu0 0.0
  %445 = vmatmul.mubr.f32.gmra.mrb[0].mxu0 %v70
  %v446 = vpop.f32.mrb[0].mxu0
  %v447 = vadd.f32 %v46, %v446
  %v448 = vpop.f32.mrb[0].mxu0
  %v449 = vadd.f32 %v46, %v448
  %450 = vdwg.mxu0
  %451 = vmatprep.subr.mxu0 %v91
  %452 = vmatpush1.msra.mxu0 %v89
  %453 = vmatprep.subr.mxu0 0.0
  %454 = vmatpush1.msra.mxu0 0.0
  %455 = vmatprep.subr.mxu0 0.0
  %456 = vmatpush1.msra.mxu0 0.0
  %457 = vmatprep.subr.mxu0 0.0
  %458 = vmatpush1.msra.mxu0 0.0
  %459 = vmatprep.subr.mxu0 0.0
  %460 = vmatpush1.msra.mxu0 0.0
  %461 = vmatprep.subr.mxu0 0.0
  %462 = vmatpush1.msra.mxu0 0.0
  %463 = vmatprep.subr.mxu0 0.0
  %464 = vmatpush1.msra.mxu0 0.0
  %465 = vmatprep.subr.mxu0 0.0
  %466 = vmatpush1.msra.mxu0 0.0
  %467 = vmatprep.subr.mxu0 0.0
  %468 = vmatpush1.msra.mxu0 0.0
  %469 = vmatprep.subr.mxu0 0.0
  %470 = vmatpush1.msra.mxu0 0.0
  %471 = vmatprep.subr.mxu0 0.0
  %472 = vmatpush1.msra.mxu0 0.0
  %473 = vmatprep.subr.mxu0 0.0
  %474 = vmatpush1.msra.mxu0 0.0
  %475 = vmatprep.subr.mxu0 0.0
  %476 = vmatpush1.msra.mxu0 0.0
  %477 = vmatprep.subr.mxu0 0.0
  %478 = vmatpush1.msra.mxu0 0.0
  %479 = vmatprep.subr.mxu0 0.0
  %480 = vmatpush1.msra.mxu0 0.0
  %481 = vmatprep.subr.mxu0 0.0
  %482 = vmatpush1.msra.mxu0 0.0
  %483 = vmatprep.subr.mxu0 0.0
  %484 = vmatpush1.msra.mxu0 0.0
  %485 = vmatprep.subr.mxu0 0.0
  %486 = vmatpush1.msra.mxu0 0.0
  %487 = vmatprep.subr.mxu0 0.0
  %488 = vmatpush1.msra.mxu0 0.0
  %489 = vmatprep.subr.mxu0 0.0
  %490 = vmatpush1.msra.mxu0 0.0
  %491 = vmatprep.subr.mxu0 0.0
  %492 = vmatpush1.msra.mxu0 0.0
  %493 = vmatprep.subr.mxu0 0.0
  %494 = vmatpush1.msra.mxu0 0.0
  %495 = vmatprep.subr.mxu0 0.0
  %496 = vmatpush1.msra.mxu0 0.0
  %497 = vmatprep.subr.mxu0 0.0
  %498 = vmatpush1.msra.mxu0 0.0
  %499 = vmatprep.subr.mxu0 0.0
  %500 = vmatpush1.msra.mxu0 0.0
  %501 = vmatprep.subr.mxu0 0.0
  %502 = vmatpush1.msra.mxu0 0.0
  %503 = vmatprep.subr.mxu0 0.0
  %504 = vmatpush1.msra.mxu0 0.0
  %505 = vmatprep.subr.mxu0 0.0
  %506 = vmatpush1.msra.mxu0 0.0
  %507 = vmatprep.subr.mxu0 0.0
  %508 = vmatpush1.msra.mxu0 0.0
  %509 = vmatprep.subr.mxu0 0.0
  %510 = vmatpush1.msra.mxu0 0.0
  %511 = vmatprep.subr.mxu0 0.0
  %512 = vmatpush1.msra.mxu0 0.0
  %513 = vmatprep.subr.mxu0 0.0
  %514 = vmatpush1.msra.mxu0 0.0
  %515 = vmatprep.mubr.f32.mxu0 0.0
  %516 = vmatmul.mubr.f32.gmra.mrb[0].mxu0 %v61
  %v517 = vpop.f32.mrb[0].mxu0
  %v518 = vadd.f32 %v31, %v517
  %v519 = vpop.f32.mrb[0].mxu0
  %v520 = vadd.f32 %v31, %v519
  %521 = vmatprep.mubr.f32.mxu0 0.0
  %522 = vmatmul.mubr.f32.gmra.mrb[0].mxu0 %v64
  %v523 = vpop.f32.mrb[0].mxu0
  %v524 = vadd.f32 %v36, %v523
  %v525 = vpop.f32.mrb[0].mxu0
  %v526 = vadd.f32 %v36, %v525
  %527 = vmatprep.mubr.f32.mxu0 0.0
  %528 = vmatmul.mubr.f32.gmra.mrb[0].mxu0 %v67
  %v529 = vpop.f32.mrb[0].mxu0
  %v530 = vadd.f32 %v41, %v529
  %v531 = vpop.f32.mrb[0].mxu0
  %v532 = vadd.f32 %v41, %v531
  %533 = vmatprep.mubr.f32.mxu0 0.0
  %534 = vmatmul.mubr.f32.gmra.mrb[0].mxu0 %v70
  %v535 = vpop.f32.mrb[0].mxu0
  %v536 = vadd.f32 %v46, %v535
  %v537 = vpop.f32.mrb[0].mxu0
  %v538 = vadd.f32 %v46, %v537
  %539 = vdwg.mxu0
  %540 = vmatprep.subr.mxu0 0.0
  %541 = vmatpush1.msra.mxu0 %v93
  %542 = vmatprep.subr.mxu0 0.0
  %543 = vmatpush1.msra.mxu0 0.0
  %544 = vmatprep.subr.mxu0 0.0
  %545 = vmatpush1.msra.mxu0 0.0
  %546 = vmatprep.subr.mxu0 0.0
  %547 = vmatpush1.msra.mxu0 0.0
  %548 = vmatprep.subr.mxu0 0.0
  %549 = vmatpush1.msra.mxu0 0.0
  %550 = vmatprep.subr.mxu0 0.0
  %551 = vmatpush1.msra.mxu0 0.0
  %552 = vmatprep.subr.mxu0 0.0
  %553 = vmatpush1.msra.mxu0 0.0
  %554 = vmatprep.subr.mxu0 0.0
  %555 = vmatpush1.msra.mxu0 0.0
  %556 = vmatprep.subr.mxu0 0.0
  %557 = vmatpush1.msra.mxu0 0.0
  %558 = vmatprep.subr.mxu0 0.0
  %559 = vmatpush1.msra.mxu0 0.0
  %560 = vmatprep.subr.mxu0 0.0
  %561 = vmatpush1.msra.mxu0 0.0
  %562 = vmatprep.subr.mxu0 0.0
  %563 = vmatpush1.msra.mxu0 0.0
  %564 = vmatprep.subr.mxu0 0.0
  %565 = vmatpush1.msra.mxu0 0.0
  %566 = vmatprep.subr.mxu0 0.0
  %567 = vmatpush1.msra.mxu0 0.0
  %568 = vmatprep.subr.mxu0 0.0
  %569 = vmatpush1.msra.mxu0 0.0
  %570 = vmatprep.subr.mxu0 0.0
  %571 = vmatpush1.msra.mxu0 0.0
  %572 = vmatprep.subr.mxu0 0.0
  %573 = vmatpush1.msra.mxu0 0.0
  %574 = vmatprep.subr.mxu0 0.0
  %575 = vmatpush1.msra.mxu0 0.0
  %576 = vmatprep.subr.mxu0 0.0
  %577 = vmatpush1.msra.mxu0 0.0
  %578 = vmatprep.subr.mxu0 0.0
  %579 = vmatpush1.msra.mxu0 0.0
  %580 = vmatprep.subr.mxu0 0.0
  %581 = vmatpush1.msra.mxu0 0.0
  %582 = vmatprep.subr.mxu0 0.0
  %583 = vmatpush1.msra.mxu0 0.0
  %584 = vmatprep.subr.mxu0 0.0
  %585 = vmatpush1.msra.mxu0 0.0
  %586 = vmatprep.subr.mxu0 0.0
  %587 = vmatpush1.msra.mxu0 0.0
  %588 = vmatprep.subr.mxu0 0.0
  %589 = vmatpush1.msra.mxu0 0.0
  %590 = vmatprep.subr.mxu0 0.0
  %591 = vmatpush1.msra.mxu0 0.0
  %592 = vmatprep.subr.mxu0 0.0
  %593 = vmatpush1.msra.mxu0 0.0
  %594 = vmatprep.subr.mxu0 0.0
  %595 = vmatpush1.msra.mxu0 0.0
  %596 = vmatprep.subr.mxu0 0.0
  %597 = vmatpush1.msra.mxu0 0.0
  %598 = vmatprep.subr.mxu0 0.0
  %599 = vmatpush1.msra.mxu0 0.0
  %600 = vmatprep.subr.mxu0 0.0
  %601 = vmatpush1.msra.mxu0 0.0
  %602 = vmatprep.subr.mxu0 0.0
  %603 = vmatpush1.msra.mxu0 0.0
  %604 = vmatprep.mubr.f32.mxu0 0.0
  %605 = vmatmul.mubr.f32.gmra.mrb[0].mxu0 %v61
  %v606 = vpop.f32.mrb[0].mxu0
  %v607 = vadd.f32 %v31, %v606
  %v608 = vpop.f32.mrb[0].mxu0
  %609 = vmatprep.mubr.f32.mxu0 0.0
  %610 = vmatmul.mubr.f32.gmra.mrb[0].mxu0 %v64
  %v611 = vpop.f32.mrb[0].mxu0
  %v612 = vadd.f32 %v36, %v611
  %v613 = vpop.f32.mrb[0].mxu0
  %614 = vmatprep.mubr.f32.mxu0 0.0
  %615 = vmatmul.mubr.f32.gmra.mrb[0].mxu0 %v67
  %v616 = vpop.f32.mrb[0].mxu0
  %v617 = vadd.f32 %v41, %v616
  %v618 = vpop.f32.mrb[0].mxu0
  %619 = vmatprep.mubr.f32.mxu0 0.0
  %620 = vmatmul.mubr.f32.gmra.mrb[0].mxu0 %v70
  %v621 = vpop.f32.mrb[0].mxu0
  %v622 = vadd.f32 %v46, %v621
  %v623 = vpop.f32.mrb[0].mxu0
  %624 = vdwg.mxu0
  %v625 = vxor.u32 %v162, 2147483648
  %v626 = vxor.u32 %v164, 2147483648
  %v627 = vxor.u32 %v251, 2147483648
  %v628 = vxor.u32 %v253, 2147483648
  %v629 = vxor.u32 %v340, 2147483648
  %v630 = vxor.u32 %v342, 2147483648
  %v631 = vxor.u32 %v429, 2147483648
  %v632 = vxor.u32 %v431, 2147483648
  %v633 = vxor.u32 %v518, 2147483648
  %v634 = vxor.u32 %v520, 2147483648
  %v635 = vxor.u32 %v607, 2147483648
  %v636 = vxor.u32 %v168, 2147483648
  %v637 = vxor.u32 %v170, 2147483648
  %v638 = vxor.u32 %v257, 2147483648
  %v639 = vxor.u32 %v259, 2147483648
  %v640 = vxor.u32 %v346, 2147483648
  %v641 = vxor.u32 %v348, 2147483648
  %v642 = vxor.u32 %v435, 2147483648
  %v643 = vxor.u32 %v437, 2147483648
  %v644 = vxor.u32 %v524, 2147483648
  %v645 = vxor.u32 %v526, 2147483648
  %v646 = vxor.u32 %v612, 2147483648
  %v647 = vxor.u32 %v174, 2147483648
  %v648 = vxor.u32 %v176, 2147483648
  %v649 = vxor.u32 %v263, 2147483648
  %v650 = vxor.u32 %v265, 2147483648
  %v651 = vxor.u32 %v352, 2147483648
  %v652 = vxor.u32 %v354, 2147483648
  %v653 = vxor.u32 %v441, 2147483648
  %v654 = vxor.u32 %v443, 2147483648
  %v655 = vxor.u32 %v530, 2147483648
  %v656 = vxor.u32 %v532, 2147483648
  %v657 = vxor.u32 %v617, 2147483648
  %v658 = vxor.u32 %v180, 2147483648
  %v659 = vxor.u32 %v182, 2147483648
  %v660 = vxor.u32 %v269, 2147483648
  %v661 = vxor.u32 %v271, 2147483648
  %v662 = vxor.u32 %v358, 2147483648
  %v663 = vxor.u32 %v360, 2147483648
  %v664 = vxor.u32 %v447, 2147483648
  %v665 = vxor.u32 %v449, 2147483648
  %v666 = vxor.u32 %v536, 2147483648
  %v667 = vxor.u32 %v538, 2147483648
  %v668 = vxor.u32 %v622, 2147483648
  %v669 = vmul.f32 %v625, 1.442695
  %v670 = vpow.pop %v669
  %v671 = vmul.f32 %v626, 1.442695
  %v672 = vpow.pop %v671
  %v673 = vmul.f32 %v627, 1.442695
  %v674 = vpow.pop %v673
  %v675 = vmul.f32 %v628, 1.442695
  %v676 = vpow.pop %v675
  %v677 = vmul.f32 %v629, 1.442695
  %v678 = vpow.pop %v677
  %v679 = vmul.f32 %v630, 1.442695
  %v680 = vpow.pop %v679
  %v681 = vmul.f32 %v631, 1.442695
  %v682 = vpow.pop %v681
  %v683 = vmul.f32 %v632, 1.442695
  %v684 = vpow.pop %v683
  %v685 = vmul.f32 %v633, 1.442695
  %v686 = vpow.pop %v685
  %v687 = vmul.f32 %v634, 1.442695
  %v688 = vpow.pop %v687
  %v689 = vmul.f32 %v635, 1.442695
  %v690 = vpow.pop %v689
  %v691 = vmul.f32 %v636, 1.442695
  %v692 = vpow.pop %v691
  %v693 = vmul.f32 %v637, 1.442695
  %v694 = vpow.pop %v693
  %v695 = vmul.f32 %v638, 1.442695
  %v696 = vpow.pop %v695
  %v697 = vmul.f32 %v639, 1.442695
  %v698 = vpow.pop %v697
  %v699 = vmul.f32 %v640, 1.442695
  %v700 = vpow.pop %v699
  %v701 = vmul.f32 %v641, 1.442695
  %v702 = vpow.pop %v701
  %v703 = vmul.f32 %v642, 1.442695
  %v704 = vpow.pop %v703
  %v705 = vmul.f32 %v643, 1.442695
  %v706 = vpow.pop %v705
  %v707 = vmul.f32 %v644, 1.442695
  %v708 = vpow.pop %v707
  %v709 = vmul.f32 %v645, 1.442695
  %v710 = vpow.pop %v709
  %v711 = vmul.f32 %v646, 1.442695
  %v712 = vpow.pop %v711
  %v713 = vmul.f32 %v647, 1.442695
  %v714 = vpow.pop %v713
  %v715 = vmul.f32 %v648, 1.442695
  %v716 = vpow.pop %v715
  %v717 = vmul.f32 %v649, 1.442695
  %v718 = vpow.pop %v717
  %v719 = vmul.f32 %v650, 1.442695
  %v720 = vpow.pop %v719
  %v721 = vmul.f32 %v651, 1.442695
  %v722 = vpow.pop %v721
  %v723 = vmul.f32 %v652, 1.442695
  %v724 = vpow.pop %v723
  %v725 = vmul.f32 %v653, 1.442695
  %v726 = vpow.pop %v725
  %v727 = vmul.f32 %v654, 1.442695
  %v728 = vpow.pop %v727
  %v729 = vmul.f32 %v655, 1.442695
  %v730 = vpow.pop %v729
  %v731 = vmul.f32 %v656, 1.442695
  %v732 = vpow.pop %v731
  %v733 = vmul.f32 %v657, 1.442695
  %v734 = vpow.pop %v733
  %v735 = vmul.f32 %v658, 1.442695
  %v736 = vpow.pop %v735
  %v737 = vmul.f32 %v659, 1.442695
  %v738 = vpow.pop %v737
  %v739 = vmul.f32 %v660, 1.442695
  %v740 = vpow.pop %v739
  %v741 = vmul.f32 %v661, 1.442695
  %v742 = vpow.pop %v741
  %v743 = vmul.f32 %v662, 1.442695
  %v744 = vpow.pop %v743
  %v745 = vmul.f32 %v663, 1.442695
  %v746 = vpow.pop %v745
  %v747 = vmul.f32 %v664, 1.442695
  %v748 = vpow.pop %v747
  %v749 = vmul.f32 %v665, 1.442695
  %v750 = vpow.pop %v749
  %v751 = vmul.f32 %v666, 1.442695
  %v752 = vpow.pop %v751
  %v753 = vmul.f32 %v667, 1.442695
  %v754 = vpow.pop %v753
  %v755 = vmul.f32 %v668, 1.442695
  %v756 = vpow.pop %v755
  %v757 = vadd.f32 %v670, 1.0
  %v758 = vadd.f32 %v672, 1.0
  %v759 = vadd.f32 %v674, 1.0
  %v760 = vadd.f32 %v676, 1.0
  %v761 = vadd.f32 %v678, 1.0
  %v762 = vadd.f32 %v680, 1.0
  %v763 = vadd.f32 %v682, 1.0
  %v764 = vadd.f32 %v684, 1.0
  %v765 = vadd.f32 %v686, 1.0
  %v766 = vadd.f32 %v688, 1.0
  %v767 = vadd.f32 %v690, 1.0
  %v768 = vadd.f32 %v692, 1.0
  %v769 = vadd.f32 %v694, 1.0
  %v770 = vadd.f32 %v696, 1.0
  %v771 = vadd.f32 %v698, 1.0
  %v772 = vadd.f32 %v700, 1.0
  %v773 = vadd.f32 %v702, 1.0
  %v774 = vadd.f32 %v704, 1.0
  %v775 = vadd.f32 %v706, 1.0
  %v776 = vadd.f32 %v708, 1.0
  %v777 = vadd.f32 %v710, 1.0
  %v778 = vadd.f32 %v712, 1.0
  %v779 = vadd.f32 %v714, 1.0
  %v780 = vadd.f32 %v716, 1.0
  %v781 = vadd.f32 %v718, 1.0
  %v782 = vadd.f32 %v720, 1.0
  %v783 = vadd.f32 %v722, 1.0
  %v784 = vadd.f32 %v724, 1.0
  %v785 = vadd.f32 %v726, 1.0
  %v786 = vadd.f32 %v728, 1.0
  %v787 = vadd.f32 %v730, 1.0
  %v788 = vadd.f32 %v732, 1.0
  %v789 = vadd.f32 %v734, 1.0
  %v790 = vadd.f32 %v736, 1.0
  %v791 = vadd.f32 %v738, 1.0
  %v792 = vadd.f32 %v740, 1.0
  %v793 = vadd.f32 %v742, 1.0
  %v794 = vadd.f32 %v744, 1.0
  %v795 = vadd.f32 %v746, 1.0
  %v796 = vadd.f32 %v748, 1.0
  %v797 = vadd.f32 %v750, 1.0
  %v798 = vadd.f32 %v752, 1.0
  %v799 = vadd.f32 %v754, 1.0
  %v800 = vadd.f32 %v756, 1.0
  %v801 = vrcp.pop %v757
  %v802 = vmul.f32 1.0, %v801
  %v803 = vrcp.pop %v758
  %v804 = vmul.f32 1.0, %v803
  %v805 = vrcp.pop %v759
  %v806 = vmul.f32 1.0, %v805
  %v807 = vrcp.pop %v760
  %v808 = vmul.f32 1.0, %v807
  %v809 = vrcp.pop %v761
  %v810 = vmul.f32 1.0, %v809
  %v811 = vrcp.pop %v762
  %v812 = vmul.f32 1.0, %v811
  %v813 = vrcp.pop %v763
  %v814 = vmul.f32 1.0, %v813
  %v815 = vrcp.pop %v764
  %v816 = vmul.f32 1.0, %v815
  %v817 = vrcp.pop %v765
  %v818 = vmul.f32 1.0, %v817
  %v819 = vrcp.pop %v766
  %v820 = vmul.f32 1.0, %v819
  %v821 = vrcp.pop %v767
  %v822 = vmul.f32 1.0, %v821
  %v823 = vrcp.pop %v768
  %v824 = vmul.f32 1.0, %v823
  %v825 = vrcp.pop %v769
  %v826 = vmul.f32 1.0, %v825
  %v827 = vrcp.pop %v770
  %v828 = vmul.f32 1.0, %v827
  %v829 = vrcp.pop %v771
  %v830 = vmul.f32 1.0, %v829
  %v831 = vrcp.pop %v772
  %v832 = vmul.f32 1.0, %v831
  %v833 = vrcp.pop %v773
  %v834 = vmul.f32 1.0, %v833
  %v835 = vrcp.pop %v774
  %v836 = vmul.f32 1.0, %v835
  %v837 = vrcp.pop %v775
  %v838 = vmul.f32 1.0, %v837
  %v839 = vrcp.pop %v776
  %v840 = vmul.f32 1.0, %v839
  %v841 = vrcp.pop %v777
  %v842 = vmul.f32 1.0, %v841
  %v843 = vrcp.pop %v778
  %v844 = vmul.f32 1.0, %v843
  %v845 = vrcp.pop %v779
  %v846 = vmul.f32 1.0, %v845
  %v847 = vrcp.pop %v780
  %v848 = vmul.f32 1.0, %v847
  %v849 = vrcp.pop %v781
  %v850 = vmul.f32 1.0, %v849
  %v851 = vrcp.pop %v782
  %v852 = vmul.f32 1.0, %v851
  %v853 = vrcp.pop %v783
  %v854 = vmul.f32 1.0, %v853
  %v855 = vrcp.pop %v784
  %v856 = vmul.f32 1.0, %v855
  %v857 = vrcp.pop %v785
  %v858 = vmul.f32 1.0, %v857
  %v859 = vrcp.pop %v786
  %v860 = vmul.f32 1.0, %v859
  %v861 = vrcp.pop %v787
  %v862 = vmul.f32 1.0, %v861
  %v863 = vrcp.pop %v788
  %v864 = vmul.f32 1.0, %v863
  %v865 = vrcp.pop %v789
  %v866 = vmul.f32 1.0, %v865
  %v867 = vrcp.pop %v790
  %v868 = vmul.f32 1.0, %v867
  %v869 = vrcp.pop %v791
  %v870 = vmul.f32 1.0, %v869
  %v871 = vrcp.pop %v792
  %v872 = vmul.f32 1.0, %v871
  %v873 = vrcp.pop %v793
  %v874 = vmul.f32 1.0, %v873
  %v875 = vrcp.pop %v794
  %v876 = vmul.f32 1.0, %v875
  %v877 = vrcp.pop %v795
  %v878 = vmul.f32 1.0, %v877
  %v879 = vrcp.pop %v796
  %v880 = vmul.f32 1.0, %v879
  %v881 = vrcp.pop %v797
  %v882 = vmul.f32 1.0, %v881
  %v883 = vrcp.pop %v798
  %v884 = vmul.f32 1.0, %v883
  %v885 = vrcp.pop %v799
  %v886 = vmul.f32 1.0, %v885
  %v887 = vrcp.pop %v800
  %v888 = vmul.f32 1.0, %v887
  %889 = vst [vmem:[%s3] sm:$0xff] %v802
  %890 = vst [vmem:[%s3 + $0x8] sm:$0xff] %v804
  %891 = vst [vmem:[%s3 + $0x10] sm:$0xff] %v806
  %892 = vst [vmem:[%s3 + $0x18] sm:$0xff] %v808
  %893 = vst [vmem:[%s3 + $0x20] sm:$0xff] %v810
  %894 = vst [vmem:[%s3 + $0x28] sm:$0xff] %v812
  %895 = vst [vmem:[%s3 + $0x30] sm:$0xff] %v814
  %896 = vst [vmem:[%s3 + $0x38] sm:$0xff] %v816
  %897 = vst [vmem:[%s3 + $0x40] sm:$0xff] %v818
  %898 = vst [vmem:[%s3 + $0x48] sm:$0xff] %v820
  %899 = vst [vmem:[%s3 + $0x50] sm:$0xff] %v822
  %900 = vst [vmem:[%s3 + $0x58] sm:$0xff] %v824
  %901 = vst [vmem:[%s3 + $0x60] sm:$0xff] %v826
  %902 = vst [vmem:[%s3 + $0x68] sm:$0xff] %v828
  %903 = vst [vmem:[%s3 + $0x70] sm:$0xff] %v830
  %904 = vst [vmem:[%s3 + $0x78] sm:$0xff] %v832
  %905 = vst [vmem:[%s3 + $0x80] sm:$0xff] %v834
  %906 = vst [vmem:[%s3 + $0x88] sm:$0xff] %v836
  %907 = vst [vmem:[%s3 + $0x90] sm:$0xff] %v838
  %908 = vst [vmem:[%s3 + $0x98] sm:$0xff] %v840
  %909 = vst [vmem:[%s3 + $0xa0] sm:$0xff] %v842
  %910 = vst [vmem:[%s3 + $0xa8] sm:$0xff] %v844
  %911 = vst [vmem:[%s3 + $0xb0] sm:$0xff] %v846
  %912 = vst [vmem:[%s3 + $0xb8] sm:$0xff] %v848
  %913 = vst [vmem:[%s3 + $0xc0] sm:$0xff] %v850
  %914 = vst [vmem:[%s3 + $0xc8] sm:$0xff] %v852
  %915 = vst [vmem:[%s3 + $0xd0] sm:$0xff] %v854
  %916 = vst [vmem:[%s3 + $0xd8] sm:$0xff] %v856
  %917 = vst [vmem:[%s3 + $0xe0] sm:$0xff] %v858
  %918 = vst [vmem:[%s3 + $0xe8] sm:$0xff] %v860
  %919 = vst [vmem:[%s3 + $0xf0] sm:$0xff] %v862
  %920 = vst [vmem:[%s3 + $0xf8] sm:$0xff] %v864
  %921 = vst [vmem:[%s3 + $0x100] sm:$0xff] %v866
  %922 = vst [vmem:[%s3 + $0x108] sm:$0xff] %v868
  %923 = vst [vmem:[%s3 + $0x110] sm:$0xff] %v870
  %924 = vst [vmem:[%s3 + $0x118] sm:$0xff] %v872
  %925 = vst [vmem:[%s3 + $0x120] sm:$0xff] %v874
  %926 = vst [vmem:[%s3 + $0x128] sm:$0xff] %v876
  %927 = vst [vmem:[%s3 + $0x130] sm:$0xff] %v878
  %928 = vst [vmem:[%s3 + $0x138] sm:$0xff] %v880
  %929 = vst [vmem:[%s3 + $0x140] sm:$0xff] %v882
  %930 = vst [vmem:[%s3 + $0x148] sm:$0xff] %v884
  %931 = vst [vmem:[%s3 + $0x150] sm:$0xff] %v886
  %932 = vst [vmem:[%s3 + $0x158] sm:$0xff] %v888
  // Predicated region
  $region14: #{model_forward.3} parent=0 // pred_check
    _
  $region15: #{model_forward.3} parent=0 // pred_check_branch
    %934 = sbr.rel (0) target = $region17
  $region16: #{model_forward.3} parent=0 // pred_region
    _
  $region17: #{model_forward.3} parent=0 // pred_fallthru
    _
  // Predicated region
  $region18: #{model_forward.3} parent=0 // pred_check
    _
  $region19: #{model_forward.3} parent=0 // pred_check_branch
    %936 = sbr.rel (0) target = $region21
  $region20: #{model_forward.3} parent=0 // pred_region
    _
  $region21: #{model_forward.3} parent=0 // pred_fallthru
    _

</llo_original>
